<compile_context>
chip_gen: v7x
topology: tpu7x:2x2x1
jax: 0.10.0
libtpu: 0.0.40
codegen_flags: <defaults>
</compile_context>

<pallas_src>
import functools

import jax
import jax.numpy as jnp
from jax import lax
from jax.experimental import pallas as pl
from jax.experimental.pallas import tpu as pltpu

PARAM_KEYS = ('wqkv', 'bqkv', 'wo', 'bo', 'g1', 'be1',
              'w1', 'b1', 'w2', 'b2', 'g2', 'be2')


def _layer_norm(x, gamma, beta, eps):
    mean = jnp.mean(x, axis=-1, keepdims=True)
    var = jnp.mean(jnp.square(x - mean), axis=-1, keepdims=True)
    return (x - mean) * lax.rsqrt(var + eps) * gamma + beta


def sasrec_layer_stack_kernel(
        x_ref, bias_ref,
        wqkv_ref, bqkv_ref, wo_ref, bo_ref,
        g1_ref, be1_ref, w1_ref, b1_ref, w2_ref, b2_ref, g2_ref, be2_ref,
        out_ref, *, n_head, eps):
    """One grid step = one post-norm TransformerEncoderLayer on one (TB, L, D) batch tile.

    The output block is resident across the layer grid axis (its index_map ignores the layer
    index), so it carries the activations from layer to layer entirely in VMEM.
    """
    layer = pl.program_id(1)

    @pl.when(layer == 0)
    def _seed():
        out_ref[...] = x_ref[...]          # embeddings -> resident activation block

    x = out_ref[...]                       # (TB, L, D) float32
    TB, L, D = x.shape
    hd = D // n_head
    cdt = wqkv_ref.dtype                   # bf16 MXU operands, f32 accumulate

    bias = bias_ref[...]                   # (TB, L, L) additive causal + key-padding mask (f32)
    wqkv, bqkv = wqkv_ref[0], bqkv_ref[0]  # (D, 3D), (1, 3D)
    wo, bo = wo_ref[0], bo_ref[0]
    g1, be1 = g1_ref[0], be1_ref[0]
    w1, b1 = w1_ref[0], b1_ref[0]
    w2, b2 = w2_ref[0], b2_ref[0]
    g2, be2 = g2_ref[0], be2_ref[0]

    x2d = x.reshape(TB * L, D)

    # Fused QKV projection over the whole (TB*L, D) slab.  The 1/sqrt(hd) attention scale is
    # already folded into the Q columns of wqkv / bqkv.
    qkv = jnp.dot(x2d.astype(cdt), wqkv, preferred_element_type=jnp.float32) + bqkv

    def split_heads(m):                    # (TB*L, D) -> (TB*n_head, L, hd)
        return m.reshape(TB, L, n_head, hd).swapaxes(1, 2).reshape(TB * n_head, L, hd)

    q = split_heads(qkv[:, 0 * D:1 * D]).astype(cdt)
    k = split_heads(qkv[:, 1 * D:2 * D]).astype(cdt)
    v = split_heads(qkv[:, 2 * D:3 * D]).astype(cdt)

    # Batched multi-head attention: heads folded into the batch dim of a single dot_general.
    s = jnp.einsum('bqd,bkd->bqk', q, k, preferred_element_type=jnp.float32)  # (TB*H, L, L)
    bias_h = jnp.broadcast_to(bias[:, None, :, :], (TB, n_head, L, L))
    s = s + bias_h.reshape(TB * n_head, L, L)
    m_max = jnp.max(s, axis=-1, keepdims=True)
    e = jnp.exp(s - m_max)                                       # f32 softmax (mask-safe)
    p = e * pl.reciprocal(jnp.sum(e, axis=-1, keepdims=True), approx=True)
    ctx = jnp.einsum('bqk,bkd->bqd', p.astype(cdt), v,
                     preferred_element_type=jnp.float32)         # (TB*n_head, L, hd)
    ctx = ctx.reshape(TB, n_head, L, hd).swapaxes(1, 2).reshape(TB * L, D)

    attn = jnp.dot(ctx.astype(cdt), wo, preferred_element_type=jnp.float32) + bo
    y = _layer_norm(x2d + attn, g1, be1, eps)                    # src = norm1(src + attn)

    h1 = jnp.maximum(jnp.dot(y.astype(cdt), w1, preferred_element_type=jnp.float32) + b1,
                     0.0)                                        # relu
    f = jnp.dot(h1.astype(cdt), w2, preferred_element_type=jnp.float32) + b2
    out = _layer_norm(y + f, g2, be2, eps)                       # src = norm2(src + ff)

    out_ref[...] = out.reshape(TB, L, D)                         # single lane-dense slab store


def sasrec_transformer(x, bias, params, *, n_head, eps, batch_block=None):
    """Run all transformer layers in one fused pallas_call."""
    B, L, D = x.shape
    n_layer = params['wqkv'].shape[0]
    H = params['w1'].shape[-1]
    if batch_block is None:
        batch_block = B
    assert B % batch_block == 0, "batch must be divisible by batch_block"
    nb = B // batch_block

    act_spec = pl.BlockSpec((batch_block, L, D), lambda b, l: (b, 0, 0))
    bias_spec = pl.BlockSpec((batch_block, L, L), lambda b, l: (b, 0, 0))

    def weight_spec(arr):                  # stacked (n_layer, R, C): one layer slice per step
        return pl.BlockSpec((1,) + arr.shape[1:], lambda b, l: (l, 0, 0))

    in_specs = [act_spec, bias_spec] + [weight_spec(params[k]) for k in PARAM_KEYS]

    flops_per_layer = (2 * B * L * D * 3 * D        # QKV projection
                       + 4 * B * L * L * D          # QK^T and PV
                       + 2 * B * L * D * D          # output projection
                       + 4 * B * L * D * H)         # FFN (two matmuls)
    weight_bytes = sum(int(params[k].size) * params[k].dtype.itemsize for k in PARAM_KEYS)
    cost = pl.CostEstimate(
        flops=n_layer * flops_per_layer,
        transcendentals=n_layer * B * n_head * L * L,
        bytes_accessed=2 * B * L * D * 4 + B * L * L * 4 + nb * weight_bytes)

    kern = functools.partial(sasrec_layer_stack_kernel, n_head=n_head, eps=float(eps))
    return pl.pallas_call(
        kern,
        out_shape=jax.ShapeDtypeStruct((B, L, D), jnp.float32),
        grid=(nb, n_layer),
        in_specs=in_specs,
        out_specs=act_spec,
        compiler_params=pltpu.CompilerParams(
            dimension_semantics=("parallel", "arbitrary"),
            vmem_limit_bytes=32 * 1024 * 1024),       # well under v7x's 64 MiB physical VMEM
        cost_estimate=cost,
    )(x, bias, *[params[k] for k in PARAM_KEYS])


def init_params(key, *, num_items, max_seq_len, embed_dim, n_head,
                hidden_size, n_layer, reverse_pos):
    keys = jax.random.split(key, 2 + n_layer)

    def rnd(k, shape, scale=0.05):
        return jax.random.normal(k, shape, jnp.float32) * scale

    item_emb = rnd(keys[0], (num_items, embed_dim), 0.02)
    item_emb = item_emb.at[0].set(0.0)          # padding_idx=0 of the item encoder
    n_pos = max_seq_len + 1 if reverse_pos else max_seq_len
    pos_emb = rnd(keys[1], (n_pos, embed_dim), 0.02)
    if reverse_pos:
        pos_emb = pos_emb.at[0].set(0.0)        # padding_idx=0 of position_emb

    D, H = embed_dim, hidden_size
    layers = []
    for l in range(n_layer):
        lk = jax.random.split(keys[2 + l], 4)
        layers.append(dict(
            wqkv=rnd(lk[0], (D, 3 * D)), bqkv=jnp.zeros((1, 3 * D), jnp.float32),
            wo=rnd(lk[1], (D, D)),       bo=jnp.zeros((1, D), jnp.float32),
            g1=jnp.ones((1, D), jnp.float32), be1=jnp.zeros((1, D), jnp.float32),
            w1=rnd(lk[2], (D, H)),       b1=jnp.zeros((1, H), jnp.float32),
            w2=rnd(lk[3], (H, D)),       b2=jnp.zeros((1, D), jnp.float32),
            g2=jnp.ones((1, D), jnp.float32), be2=jnp.zeros((1, D), jnp.float32),
        ))
    return item_emb, pos_emb, layers


def stack_layer_params(layers, *, n_head, compute_dtype=jnp.bfloat16):
    """Stack per-layer params on a leading (n_layer,) axis, fold the attention scale into the
    Q projection, and cast matmul weights to the MXU compute dtype (biases/LN params stay f32)."""
    D = layers[0]['wqkv'].shape[0]
    hd = D // n_head
    q_scale = 1.0 / float(hd) ** 0.5

    def stack(key, dtype):
        return jnp.stack([l[key] for l in layers]).astype(dtype)

    wqkv = jnp.stack([l['wqkv'] for l in layers])        # (n_layer, D, 3D)
    bqkv = jnp.stack([l['bqkv'] for l in layers])        # (n_layer, 1, 3D)
    wqkv = wqkv.at[:, :, :D].multiply(q_scale)
    bqkv = bqkv.at[:, :, :D].multiply(q_scale)

    return dict(
        wqkv=wqkv.astype(compute_dtype), bqkv=bqkv.astype(jnp.float32),
        wo=stack('wo', compute_dtype),   bo=stack('bo', jnp.float32),
        g1=stack('g1', jnp.float32),     be1=stack('be1', jnp.float32),
        w1=stack('w1', compute_dtype),   b1=stack('b1', jnp.float32),
        w2=stack('w2', compute_dtype),   b2=stack('b2', jnp.float32),
        g2=stack('g2', jnp.float32),     be2=stack('be2', jnp.float32),
    )


def sasrec_query_encoder_forward(user_hist, seqlen, item_emb, pos_emb, stacked, *,
                                 n_head, reverse_pos=True, bidirectional=False,
                                 layer_norm_eps=1e-5, pooling_type='last',
                                 need_pooling=True, batch_block=None):
    """Eval-mode forward of SASRecQueryEncoder (dropout = identity)."""
    B, L = user_hist.shape

    if reverse_pos:
        positions = jnp.broadcast_to(jnp.arange(L, dtype=jnp.int32)[None, :], (B, L))
        padding_pos = positions >= seqlen[:, None]
        positions = jnp.where(padding_pos, 0, seqlen[:, None] - positions)
    else:
        positions = jnp.broadcast_to(jnp.arange(L, dtype=jnp.int32)[None, :], (B, L))

    position_embs = jnp.take(pos_emb, positions, axis=0)               # (B, L, D)
    seq_embs = jnp.take(item_emb, user_hist, axis=0)                   # (B, L, D)
    x = (seq_embs + position_embs).astype(jnp.float32)                 # input_dropout = identity

    # Combined additive attention bias (causal + src_key_padding_mask), built once in f32.
    neg = -1e30
    pad_bias = jnp.where(user_hist == 0, neg, 0.0).astype(jnp.float32)[:, None, :]   # (B, 1, L)
    if not bidirectional:
        row = jnp.arange(L, dtype=jnp.int32)[:, None]
        col = jnp.arange(L, dtype=jnp.int32)[None, :]
        causal = jnp.where(col > row, neg, 0.0).astype(jnp.float32)[None, :, :]      # (1, L, L)
        bias = jnp.broadcast_to(causal + pad_bias, (B, L, L))
    else:
        bias = jnp.broadcast_to(pad_bias, (B, L, L))

    out = sasrec_transformer(x, bias, stacked, n_head=n_head, eps=layer_norm_eps,
                             batch_block=batch_block)                  # (B, L, D) f32

    if not need_pooling:
        return out
    if pooling_type == 'last':
        # assumes seqlen >= 1; clip is a defensive guard only
        idx = jnp.clip(seqlen - 1, 0, L - 1)[:, None, None]
        idx = jnp.broadcast_to(idx, (B, 1, out.shape[-1]))
        return jnp.take_along_axis(out, idx, axis=1)[:, 0, :]
    # TODO(synk): other SeqPoolingLayer modes ('mean', 'sum', 'mask') are not implemented.
    raise NotImplementedError(pooling_type)


if __name__ == "__main__":
    # small config consistent with the module
    B, L = 4, 8                 # batch, max_seq_len
    D, H = 32, 64               # embed_dim, dim_feedforward (hidden_size)
    N_HEAD, N_LAYER = 2, 2
    NUM_ITEMS = 50
    REVERSE_POS = True
    LAYER_NORM_EPS = 1e-5
    BATCH_BLOCK = 2             # grid = (B//BATCH_BLOCK, N_LAYER) = (2, 2)

    key = jax.random.PRNGKey(0)
    k_items, k_params = jax.random.split(key)

    item_emb, pos_emb, layers = init_params(
        k_params, num_items=NUM_ITEMS, max_seq_len=L, embed_dim=D,
        n_head=N_HEAD, hidden_size=H, n_layer=N_LAYER, reverse_pos=REVERSE_POS)
    stacked = stack_layer_params(layers, n_head=N_HEAD, compute_dtype=jnp.bfloat16)

    # batch['in_<fiid>']: item ids, right-padded with 0; batch['seqlen']
    seqlen = jnp.array([5, 8, 3, 1], dtype=jnp.int32)
    raw = jax.random.randint(k_items, (B, L), 1, NUM_ITEMS, dtype=jnp.int32)
    valid = jnp.arange(L, dtype=jnp.int32)[None, :] < seqlen[:, None]
    user_hist = jnp.where(valid, raw, 0)

    out = sasrec_query_encoder_forward(
        user_hist, seqlen, item_emb, pos_emb, stacked,
        n_head=N_HEAD, reverse_pos=REVERSE_POS, bidirectional=False,
        layer_norm_eps=LAYER_NORM_EPS, pooling_type='last', need_pooling=True,
        batch_block=BATCH_BLOCK)
    out = jax.block_until_ready(out)

    assert out.shape == (B, D) and out.dtype == jnp.float32
    assert bool(jnp.all(jnp.isfinite(out)))
    print("KERNEL_OK")
</pallas_src>

<mosaic_0001>
module attributes {stable_mosaic.version = 11 : i64} {
  func.func @sasrec_layer_stack_kernel(%arg0: i32, %arg1: i32, %arg2: memref<2x8x32xf32, #tpu.memory_space<vmem>>, %arg3: memref<2x8x8xf32, #tpu.memory_space<vmem>>, %arg4: memref<1x32x96xbf16, #tpu.memory_space<vmem>>, %arg5: memref<1x1x96xf32, #tpu.memory_space<vmem>>, %arg6: memref<1x32x32xbf16, #tpu.memory_space<vmem>>, %arg7: memref<1x1x32xf32, #tpu.memory_space<vmem>>, %arg8: memref<1x1x32xf32, #tpu.memory_space<vmem>>, %arg9: memref<1x1x32xf32, #tpu.memory_space<vmem>>, %arg10: memref<1x32x64xbf16, #tpu.memory_space<vmem>>, %arg11: memref<1x1x64xf32, #tpu.memory_space<vmem>>, %arg12: memref<1x64x32xbf16, #tpu.memory_space<vmem>>, %arg13: memref<1x1x32xf32, #tpu.memory_space<vmem>>, %arg14: memref<1x1x32xf32, #tpu.memory_space<vmem>>, %arg15: memref<1x1x32xf32, #tpu.memory_space<vmem>>, %arg16: memref<2x8x32xf32, #tpu.memory_space<vmem>>) attributes {dimension_semantics = [#tpu.dimension_semantics<parallel>, #tpu.dimension_semantics<arbitrary>], iteration_bounds = array<i64: 2, 2>, scalar_prefetch = 0 : i64, scratch_operands = 0 : i64, tpu.core_type = #tpu.core_type<tc>, window_params = [{transform_indices = @transform_0, window_bounds = array<i64: 2, 8, 32>}, {transform_indices = @transform_1, window_bounds = array<i64: 2, 8, 8>}, {transform_indices = @transform_2, window_bounds = array<i64: 1, 32, 96>}, {transform_indices = @transform_3, window_bounds = array<i64: 1, 1, 96>}, {transform_indices = @transform_4, window_bounds = array<i64: 1, 32, 32>}, {transform_indices = @transform_5, window_bounds = array<i64: 1, 1, 32>}, {transform_indices = @transform_6, window_bounds = array<i64: 1, 1, 32>}, {transform_indices = @transform_7, window_bounds = array<i64: 1, 1, 32>}, {transform_indices = @transform_8, window_bounds = array<i64: 1, 32, 64>}, {transform_indices = @transform_9, window_bounds = array<i64: 1, 1, 64>}, {transform_indices = @transform_10, window_bounds = array<i64: 1, 64, 32>}, {transform_indices = @transform_11, window_bounds = array<i64: 1, 1, 32>}, {transform_indices = @transform_12, window_bounds = array<i64: 1, 1, 32>}, {transform_indices = @transform_13, window_bounds = array<i64: 1, 1, 32>}, {transform_indices = @transform_14, window_bounds = array<i64: 2, 8, 32>}]} {
    %c0_i32 = arith.constant 0 : i32
    %0 = arith.cmpi eq, %arg1, %c0_i32 : i32
    %1 = arith.extui %0 : i1 to i32
    %c0_i32_0 = arith.constant 0 : i32
    %2 = arith.cmpi ne, %1, %c0_i32_0 : i32
    scf.if %2 {
      %c0_63 = arith.constant 0 : index
      %c0_64 = arith.constant 0 : index
      %c0_65 = arith.constant 0 : index
      %132 = vector.load %arg2[%c0_63, %c0_64, %c0_65] : memref<2x8x32xf32, #tpu.memory_space<vmem>>, vector<2x8x32xf32>
      %c0_66 = arith.constant 0 : index
      %c0_67 = arith.constant 0 : index
      %c0_68 = arith.constant 0 : index
      %133 = vector.load %arg16[%c0_66, %c0_67, %c0_68] : memref<2x8x32xf32, #tpu.memory_space<vmem>>, vector<2x8x32xf32>
      tpu.vector_store %arg16[%c0_66, %c0_67, %c0_68], %132 {strides = array<i32>} : memref<2x8x32xf32, #tpu.memory_space<vmem>>, vector<2x8x32xf32>,
    } else {
    }
    %c0 = arith.constant 0 : index
    %c0_1 = arith.constant 0 : index
    %c0_2 = arith.constant 0 : index
    %3 = vector.load %arg16[%c0, %c0_1, %c0_2] : memref<2x8x32xf32, #tpu.memory_space<vmem>>, vector<2x8x32xf32>
    %c0_3 = arith.constant 0 : index
    %c0_4 = arith.constant 0 : index
    %c0_5 = arith.constant 0 : index
    %4 = vector.load %arg3[%c0_3, %c0_4, %c0_5] : memref<2x8x8xf32, #tpu.memory_space<vmem>>, vector<2x8x8xf32>
    %c0_6 = arith.constant 0 : index
    %c0_7 = arith.constant 0 : index
    %c0_8 = arith.constant 0 : index
    %5 = vector.load %arg4[%c0_6, %c0_7, %c0_8] : memref<1x32x96xbf16, #tpu.memory_space<vmem>>, vector<1x32x96xbf16>
    %6 = vector.shape_cast %5 : vector<1x32x96xbf16> to vector<32x96xbf16>
    %c0_9 = arith.constant 0 : index
    %c0_10 = arith.constant 0 : index
    %c0_11 = arith.constant 0 : index
    %7 = vector.load %arg5[%c0_9, %c0_10, %c0_11] : memref<1x1x96xf32, #tpu.memory_space<vmem>>, vector<1x1x96xf32>
    %8 = vector.shape_cast %7 : vector<1x1x96xf32> to vector<1x96xf32>
    %c0_12 = arith.constant 0 : index
    %c0_13 = arith.constant 0 : index
    %c0_14 = arith.constant 0 : index
    %9 = vector.load %arg6[%c0_12, %c0_13, %c0_14] : memref<1x32x32xbf16, #tpu.memory_space<vmem>>, vector<1x32x32xbf16>
    %10 = vector.shape_cast %9 : vector<1x32x32xbf16> to vector<32x32xbf16>
    %c0_15 = arith.constant 0 : index
    %c0_16 = arith.constant 0 : index
    %c0_17 = arith.constant 0 : index
    %11 = vector.load %arg7[%c0_15, %c0_16, %c0_17] : memref<1x1x32xf32, #tpu.memory_space<vmem>>, vector<1x1x32xf32>
    %12 = vector.shape_cast %11 : vector<1x1x32xf32> to vector<1x32xf32>
    %c0_18 = arith.constant 0 : index
    %c0_19 = arith.constant 0 : index
    %c0_20 = arith.constant 0 : index
    %13 = vector.load %arg8[%c0_18, %c0_19, %c0_20] : memref<1x1x32xf32, #tpu.memory_space<vmem>>, vector<1x1x32xf32>
    %14 = vector.shape_cast %13 : vector<1x1x32xf32> to vector<1x32xf32>
    %c0_21 = arith.constant 0 : index
    %c0_22 = arith.constant 0 : index
    %c0_23 = arith.constant 0 : index
    %15 = vector.load %arg9[%c0_21, %c0_22, %c0_23] : memref<1x1x32xf32, #tpu.memory_space<vmem>>, vector<1x1x32xf32>
    %16 = vector.shape_cast %15 : vector<1x1x32xf32> to vector<1x32xf32>
    %c0_24 = arith.constant 0 : index
    %c0_25 = arith.constant 0 : index
    %c0_26 = arith.constant 0 : index
    %17 = vector.load %arg10[%c0_24, %c0_25, %c0_26] : memref<1x32x64xbf16, #tpu.memory_space<vmem>>, vector<1x32x64xbf16>
    %18 = vector.shape_cast %17 : vector<1x32x64xbf16> to vector<32x64xbf16>
    %c0_27 = arith.constant 0 : index
    %c0_28 = arith.constant 0 : index
    %c0_29 = arith.constant 0 : index
    %19 = vector.load %arg11[%c0_27, %c0_28, %c0_29] : memref<1x1x64xf32, #tpu.memory_space<vmem>>, vector<1x1x64xf32>
    %20 = vector.shape_cast %19 : vector<1x1x64xf32> to vector<1x64xf32>
    %c0_30 = arith.constant 0 : index
    %c0_31 = arith.constant 0 : index
    %c0_32 = arith.constant 0 : index
    %21 = vector.load %arg12[%c0_30, %c0_31, %c0_32] : memref<1x64x32xbf16, #tpu.memory_space<vmem>>, vector<1x64x32xbf16>
    %22 = vector.shape_cast %21 : vector<1x64x32xbf16> to vector<64x32xbf16>
    %c0_33 = arith.constant 0 : index
    %c0_34 = arith.constant 0 : index
    %c0_35 = arith.constant 0 : index
    %23 = vector.load %arg13[%c0_33, %c0_34, %c0_35] : memref<1x1x32xf32, #tpu.memory_space<vmem>>, vector<1x1x32xf32>
    %24 = vector.shape_cast %23 : vector<1x1x32xf32> to vector<1x32xf32>
    %c0_36 = arith.constant 0 : index
    %c0_37 = arith.constant 0 : index
    %c0_38 = arith.constant 0 : index
    %25 = vector.load %arg14[%c0_36, %c0_37, %c0_38] : memref<1x1x32xf32, #tpu.memory_space<vmem>>, vector<1x1x32xf32>
    %26 = vector.shape_cast %25 : vector<1x1x32xf32> to vector<1x32xf32>
    %c0_39 = arith.constant 0 : index
    %c0_40 = arith.constant 0 : index
    %c0_41 = arith.constant 0 : index
    %27 = vector.load %arg15[%c0_39, %c0_40, %c0_41] : memref<1x1x32xf32, #tpu.memory_space<vmem>>, vector<1x1x32xf32>
    %28 = vector.shape_cast %27 : vector<1x1x32xf32> to vector<1x32xf32>
    %29 = vector.shape_cast %3 : vector<2x8x32xf32> to vector<16x32xf32>
    %30 = arith.truncf %29 : vector<16x32xf32> to vector<16x32xbf16>
    %cst = arith.constant dense<0.000000e+00> : vector<16x96xf32>
    %31 = tpu.matmul %30, %6, %cst {dimension_numbers = #tpu.dot_dimension_numbers<[1], [0], [0], [1], [0, 0, 1, 1], [], []>} : vector<16x32xbf16>, vector<32x96xbf16>, vector<16x96xf32> -> vector<16x96xf32>
    %32 = vector.broadcast %8 : vector<1x96xf32> to vector<16x96xf32>
    %33 = arith.addf %31, %32 : vector<16x96xf32>
    %34 = vector.extract_strided_slice %33 {offsets = [0, 0], sizes = [16, 32], strides = [1, 1]} : vector<16x96xf32> to vector<16x32xf32>
    %35 = vector.shape_cast %34 : vector<16x32xf32> to vector<2x8x2x16xf32>
    %36 = tpu.transpose %35, [0, 2, 1, 3] : vector<2x8x2x16xf32> -> vector<2x2x8x16xf32>
    %37 = vector.shape_cast %36 : vector<2x2x8x16xf32> to vector<4x8x16xf32>
    %38 = arith.truncf %37 : vector<4x8x16xf32> to vector<4x8x16xbf16>
    %39 = vector.extract_strided_slice %33 {offsets = [0, 32], sizes = [16, 32], strides = [1, 1]} : vector<16x96xf32> to vector<16x32xf32>
    %40 = vector.shape_cast %39 : vector<16x32xf32> to vector<2x8x2x16xf32>
    %41 = tpu.transpose %40, [0, 2, 1, 3] : vector<2x8x2x16xf32> -> vector<2x2x8x16xf32>
    %42 = vector.shape_cast %41 : vector<2x2x8x16xf32> to vector<4x8x16xf32>
    %43 = arith.truncf %42 : vector<4x8x16xf32> to vector<4x8x16xbf16>
    %44 = vector.extract_strided_slice %33 {offsets = [0, 64], sizes = [16, 32], strides = [1, 1]} : vector<16x96xf32> to vector<16x32xf32>
    %45 = vector.shape_cast %44 : vector<16x32xf32> to vector<2x8x2x16xf32>
    %46 = tpu.transpose %45, [0, 2, 1, 3] : vector<2x8x2x16xf32> -> vector<2x2x8x16xf32>
    %47 = vector.shape_cast %46 : vector<2x2x8x16xf32> to vector<4x8x16xf32>
    %48 = arith.truncf %47 : vector<4x8x16xf32> to vector<4x8x16xbf16>
    "tpu.trace_start"() <{level = 10 : i32, message = "bqd,bkd->bqk"}> : () -> ()
    %cst_42 = arith.constant dense<0.000000e+00> : vector<4x8x8xf32>
    %49 = tpu.matmul %38, %43, %cst_42 {dimension_numbers = #tpu.dot_dimension_numbers<[2], [2], [1], [1], [0, 0, 0, 1, 1, 1], [0], [0]>} : vector<4x8x16xbf16>, vector<4x8x16xbf16>, vector<4x8x8xf32> -> vector<4x8x8xf32>
    "tpu.trace_stop"() : () -> ()
    %50 = vector.shape_cast %4 : vector<2x8x8xf32> to vector<2x1x8x8xf32>
    %51 = vector.shape_cast %50 : vector<2x1x8x8xf32> to vector<2x1x8x8xf32>
    %52 = vector.broadcast %51 : vector<2x1x8x8xf32> to vector<2x2x8x8xf32>
    %53 = vector.shape_cast %52 : vector<2x2x8x8xf32> to vector<4x8x8xf32>
    %54 = arith.addf %49, %53 : vector<4x8x8xf32>
    %cst_43 = arith.constant dense<0xFF800000> : vector<4x8xf32>
    %55 = vector.multi_reduction <maximumf>, %54, %cst_43 [2] : vector<4x8x8xf32> to vector<4x8xf32>
    %56 = vector.shape_cast %55 : vector<4x8xf32> to vector<4x8x1xf32>
    %57 = vector.broadcast %56 : vector<4x8x1xf32> to vector<4x8x8xf32>
    %58 = arith.subf %54, %57 : vector<4x8x8xf32>
    %59 = math.exp %58 : vector<4x8x8xf32>
    %cst_44 = arith.constant dense<0.000000e+00> : vector<4x8xf32>
    %60 = vector.multi_reduction <add>, %59, %cst_44 [2] : vector<4x8x8xf32> to vector<4x8xf32>
    %61 = vector.shape_cast %60 : vector<4x8xf32> to vector<4x8x1xf32>
    %62 = tpu.reciprocal %61 {approx = true} : vector<4x8x1xf32> -> vector<4x8x1xf32>
    %63 = vector.broadcast %62 : vector<4x8x1xf32> to vector<4x8x8xf32>
    %64 = arith.mulf %59, %63 : vector<4x8x8xf32>
    %65 = arith.truncf %64 : vector<4x8x8xf32> to vector<4x8x8xbf16>
    "tpu.trace_start"() <{level = 10 : i32, message = "bqk,bkd->bqd"}> : () -> ()
    %cst_45 = arith.constant dense<0.000000e+00> : vector<4x8x16xf32>
    %66 = tpu.matmul %65, %48, %cst_45 {dimension_numbers = #tpu.dot_dimension_numbers<[2], [1], [1], [2], [0, 0, 0, 1, 1, 2], [0], [0]>} : vector<4x8x8xbf16>, vector<4x8x16xbf16>, vector<4x8x16xf32> -> vector<4x8x16xf32>
    "tpu.trace_stop"() : () -> ()
    %67 = vector.shape_cast %66 : vector<4x8x16xf32> to vector<2x2x8x16xf32>
    %68 = tpu.transpose %67, [0, 2, 1, 3] : vector<2x2x8x16xf32> -> vector<2x8x2x16xf32>
    %69 = vector.shape_cast %68 : vector<2x8x2x16xf32> to vector<16x32xf32>
    %70 = arith.truncf %69 : vector<16x32xf32> to vector<16x32xbf16>
    %cst_46 = arith.constant dense<0.000000e+00> : vector<16x32xf32>
    %71 = tpu.matmul %70, %10, %cst_46 {dimension_numbers = #tpu.dot_dimension_numbers<[1], [0], [0], [1], [0, 0, 1, 1], [], []>} : vector<16x32xbf16>, vector<32x32xbf16>, vector<16x32xf32> -> vector<16x32xf32>
    %72 = vector.broadcast %12 : vector<1x32xf32> to vector<16x32xf32>
    %73 = arith.addf %71, %72 : vector<16x32xf32>
    %74 = arith.addf %29, %73 : vector<16x32xf32>
    %cst_47 = arith.constant dense<0.000000e+00> : vector<16xf32>
    %75 = vector.multi_reduction <add>, %74, %cst_47 [1] : vector<16x32xf32> to vector<16xf32>
    %76 = vector.shape_cast %75 : vector<16xf32> to vector<16x1xf32>
    %cst_48 = arith.constant 3.200000e+01 : f32
    %77 = vector.broadcast %cst_48 : f32 to vector<16x1xf32>
    %78 = arith.divf %76, %77 : vector<16x1xf32>
    %79 = vector.broadcast %78 : vector<16x1xf32> to vector<16x32xf32>
    %80 = arith.subf %74, %79 : vector<16x32xf32>
    %81 = arith.mulf %80, %80 : vector<16x32xf32>
    %cst_49 = arith.constant dense<0.000000e+00> : vector<16xf32>
    %82 = vector.multi_reduction <add>, %81, %cst_49 [1] : vector<16x32xf32> to vector<16xf32>
    %83 = vector.shape_cast %82 : vector<16xf32> to vector<16x1xf32>
    %cst_50 = arith.constant 3.200000e+01 : f32
    %84 = vector.broadcast %cst_50 : f32 to vector<16x1xf32>
    %85 = arith.divf %83, %84 : vector<16x1xf32>
    %86 = vector.broadcast %78 : vector<16x1xf32> to vector<16x32xf32>
    %87 = arith.subf %74, %86 : vector<16x32xf32>
    %cst_51 = arith.constant 9.99999974E-6 : f32
    %88 = vector.broadcast %cst_51 : f32 to vector<16x1xf32>
    %89 = arith.addf %85, %88 : vector<16x1xf32>
    %90 = math.rsqrt %89 : vector<16x1xf32>
    %91 = vector.broadcast %90 : vector<16x1xf32> to vector<16x32xf32>
    %92 = arith.mulf %87, %91 : vector<16x32xf32>
    %93 = vector.broadcast %14 : vector<1x32xf32> to vector<16x32xf32>
    %94 = arith.mulf %92, %93 : vector<16x32xf32>
    %95 = vector.broadcast %16 : vector<1x32xf32> to vector<16x32xf32>
    %96 = arith.addf %94, %95 : vector<16x32xf32>
    %97 = arith.truncf %96 : vector<16x32xf32> to vector<16x32xbf16>
    %cst_52 = arith.constant dense<0.000000e+00> : vector<16x64xf32>
    %98 = tpu.matmul %97, %18, %cst_52 {dimension_numbers = #tpu.dot_dimension_numbers<[1], [0], [0], [1], [0, 0, 1, 1], [], []>} : vector<16x32xbf16>, vector<32x64xbf16>, vector<16x64xf32> -> vector<16x64xf32>
    %99 = vector.broadcast %20 : vector<1x64xf32> to vector<16x64xf32>
    %100 = arith.addf %98, %99 : vector<16x64xf32>
    %cst_53 = arith.constant 0.000000e+00 : f32
    %101 = vector.broadcast %cst_53 : f32 to vector<16x64xf32>
    %102 = arith.maximumf %100, %101 : vector<16x64xf32>
    %103 = arith.truncf %102 : vector<16x64xf32> to vector<16x64xbf16>
    %cst_54 = arith.constant dense<0.000000e+00> : vector<16x32xf32>
    %104 = tpu.matmul %103, %22, %cst_54 {dimension_numbers = #tpu.dot_dimension_numbers<[1], [0], [0], [1], [0, 0, 1, 1], [], []>} : vector<16x64xbf16>, vector<64x32xbf16>, vector<16x32xf32> -> vector<16x32xf32>
    %105 = vector.broadcast %24 : vector<1x32xf32> to vector<16x32xf32>
    %106 = arith.addf %104, %105 : vector<16x32xf32>
    %107 = arith.addf %96, %106 : vector<16x32xf32>
    %cst_55 = arith.constant dense<0.000000e+00> : vector<16xf32>
    %108 = vector.multi_reduction <add>, %107, %cst_55 [1] : vector<16x32xf32> to vector<16xf32>
    %109 = vector.shape_cast %108 : vector<16xf32> to vector<16x1xf32>
    %cst_56 = arith.constant 3.200000e+01 : f32
    %110 = vector.broadcast %cst_56 : f32 to vector<16x1xf32>
    %111 = arith.divf %109, %110 : vector<16x1xf32>
    %112 = vector.broadcast %111 : vector<16x1xf32> to vector<16x32xf32>
    %113 = arith.subf %107, %112 : vector<16x32xf32>
    %114 = arith.mulf %113, %113 : vector<16x32xf32>
    %cst_57 = arith.constant dense<0.000000e+00> : vector<16xf32>
    %115 = vector.multi_reduction <add>, %114, %cst_57 [1] : vector<16x32xf32> to vector<16xf32>
    %116 = vector.shape_cast %115 : vector<16xf32> to vector<16x1xf32>
    %cst_58 = arith.constant 3.200000e+01 : f32
    %117 = vector.broadcast %cst_58 : f32 to vector<16x1xf32>
    %118 = arith.divf %116, %117 : vector<16x1xf32>
    %119 = vector.broadcast %111 : vector<16x1xf32> to vector<16x32xf32>
    %120 = arith.subf %107, %119 : vector<16x32xf32>
    %cst_59 = arith.constant 9.99999974E-6 : f32
    %121 = vector.broadcast %cst_59 : f32 to vector<16x1xf32>
    %122 = arith.addf %118, %121 : vector<16x1xf32>
    %123 = math.rsqrt %122 : vector<16x1xf32>
    %124 = vector.broadcast %123 : vector<16x1xf32> to vector<16x32xf32>
    %125 = arith.mulf %120, %124 : vector<16x32xf32>
    %126 = vector.broadcast %26 : vector<1x32xf32> to vector<16x32xf32>
    %127 = arith.mulf %125, %126 : vector<16x32xf32>
    %128 = vector.broadcast %28 : vector<1x32xf32> to vector<16x32xf32>
    %129 = arith.addf %127, %128 : vector<16x32xf32>
    %130 = vector.shape_cast %129 : vector<16x32xf32> to vector<2x8x32xf32>
    %c0_60 = arith.constant 0 : index
    %c0_61 = arith.constant 0 : index
    %c0_62 = arith.constant 0 : index
    %131 = vector.load %arg16[%c0_60, %c0_61, %c0_62] : memref<2x8x32xf32, #tpu.memory_space<vmem>>, vector<2x8x32xf32>
    tpu.vector_store %arg16[%c0_60, %c0_61, %c0_62], %130 {strides = array<i32>} : memref<2x8x32xf32, #tpu.memory_space<vmem>>, vector<2x8x32xf32>,
    return
  }
  func.func @transform_0(%arg0: i32, %arg1: i32) -> (i32, i32, i32) {
    %c0_i32 = arith.constant 0 : i32
    %c0_i32_0 = arith.constant 0 : i32
    %c0_i32_1 = arith.constant 0 : i32
    return %arg0, %c0_i32, %c0_i32_0 : i32, i32, i32
  }
  func.func @transform_1(%arg0: i32, %arg1: i32) -> (i32, i32, i32) {
    %c0_i32 = arith.constant 0 : i32
    %c0_i32_0 = arith.constant 0 : i32
    %c0_i32_1 = arith.constant 0 : i32
    return %arg0, %c0_i32, %c0_i32_0 : i32, i32, i32
  }
  func.func @transform_2(%arg0: i32, %arg1: i32) -> (i32, i32, i32) {
    %c0_i32 = arith.constant 0 : i32
    %c0_i32_0 = arith.constant 0 : i32
    %c0_i32_1 = arith.constant 0 : i32
    return %arg1, %c0_i32, %c0_i32_0 : i32, i32, i32
  }
  func.func @transform_3(%arg0: i32, %arg1: i32) -> (i32, i32, i32) {
    %c0_i32 = arith.constant 0 : i32
    %c0_i32_0 = arith.constant 0 : i32
    %c0_i32_1 = arith.constant 0 : i32
    return %arg1, %c0_i32, %c0_i32_0 : i32, i32, i32
  }
  func.func @transform_4(%arg0: i32, %arg1: i32) -> (i32, i32, i32) {
    %c0_i32 = arith.constant 0 : i32
    %c0_i32_0 = arith.constant 0 : i32
    %c0_i32_1 = arith.constant 0 : i32
    return %arg1, %c0_i32, %c0_i32_0 : i32, i32, i32
  }
  func.func @transform_5(%arg0: i32, %arg1: i32) -> (i32, i32, i32) {
    %c0_i32 = arith.constant 0 : i32
    %c0_i32_0 = arith.constant 0 : i32
    %c0_i32_1 = arith.constant 0 : i32
    return %arg1, %c0_i32, %c0_i32_0 : i32, i32, i32
  }
  func.func @transform_6(%arg0: i32, %arg1: i32) -> (i32, i32, i32) {
    %c0_i32 = arith.constant 0 : i32
    %c0_i32_0 = arith.constant 0 : i32
    %c0_i32_1 = arith.constant 0 : i32
    return %arg1, %c0_i32, %c0_i32_0 : i32, i32, i32
  }
  func.func @transform_7(%arg0: i32, %arg1: i32) -> (i32, i32, i32) {
    %c0_i32 = arith.constant 0 : i32
    %c0_i32_0 = arith.constant 0 : i32
    %c0_i32_1 = arith.constant 0 : i32
    return %arg1, %c0_i32, %c0_i32_0 : i32, i32, i32
  }
  func.func @transform_8(%arg0: i32, %arg1: i32) -> (i32, i32, i32) {
    %c0_i32 = arith.constant 0 : i32
    %c0_i32_0 = arith.constant 0 : i32
    %c0_i32_1 = arith.constant 0 : i32
    return %arg1, %c0_i32, %c0_i32_0 : i32, i32, i32
  }
  func.func @transform_9(%arg0: i32, %arg1: i32) -> (i32, i32, i32) {
    %c0_i32 = arith.constant 0 : i32
    %c0_i32_0 = arith.constant 0 : i32
    %c0_i32_1 = arith.constant 0 : i32
    return %arg1, %c0_i32, %c0_i32_0 : i32, i32, i32
  }
  func.func @transform_10(%arg0: i32, %arg1: i32) -> (i32, i32, i32) {
    %c0_i32 = arith.constant 0 : i32
    %c0_i32_0 = arith.constant 0 : i32
    %c0_i32_1 = arith.constant 0 : i32
    return %arg1, %c0_i32, %c0_i32_0 : i32, i32, i32
  }
  func.func @transform_11(%arg0: i32, %arg1: i32) -> (i32, i32, i32) {
    %c0_i32 = arith.constant 0 : i32
    %c0_i32_0 = arith.constant 0 : i32
    %c0_i32_1 = arith.constant 0 : i32
    return %arg1, %c0_i32, %c0_i32_0 : i32, i32, i32
  }
  func.func @transform_12(%arg0: i32, %arg1: i32) -> (i32, i32, i32) {
    %c0_i32 = arith.constant 0 : i32
    %c0_i32_0 = arith.constant 0 : i32
    %c0_i32_1 = arith.constant 0 : i32
    return %arg1, %c0_i32, %c0_i32_0 : i32, i32, i32
  }
  func.func @transform_13(%arg0: i32, %arg1: i32) -> (i32, i32, i32) {
    %c0_i32 = arith.constant 0 : i32
    %c0_i32_0 = arith.constant 0 : i32
    %c0_i32_1 = arith.constant 0 : i32
    return %arg1, %c0_i32, %c0_i32_0 : i32, i32, i32
  }
  func.func @transform_14(%arg0: i32, %arg1: i32) -> (i32, i32, i32) {
    %c0_i32 = arith.constant 0 : i32
    %c0_i32_0 = arith.constant 0 : i32
    %c0_i32_1 = arith.constant 0 : i32
    return %arg0, %c0_i32, %c0_i32_0 : i32, i32, i32
  }
}

</mosaic_0001>

<llo_original>
// kernel: tpu_custom_call.1
$region0: #{tpu_custom_call.1}
  #allocation0 [shape = 'u32[]', space=smem, size = 0x4, offset = 0x4, fixed_abs, tag = 'smem constant byte address 0x4 - core index']
  #allocation1 [shape = 'u32[144,128]{1,0:T(1,128)}', space=vmem, size = 0x12000, scoped, tag = 'internal scratch']
  %s0 = inlined_call_operand.vmem [shape: f32[4,8,32], index: 0, kind: input, shape index: {}]
  %s1 = inlined_call_operand.vmem [shape: f32[4,8,8], index: 1, kind: input, shape index: {}]
  %s2 = inlined_call_operand.vmem [shape: bf16[2,32,96], index: 2, kind: input, shape index: {}]
  %s3 = inlined_call_operand.vmem [shape: f32[2,1,96], index: 3, kind: input, shape index: {}]
  %s4 = inlined_call_operand.hbm [shape: bf16[2,32,32], index: 4, kind: input, shape index: {}]
  %s5 = inlined_call_operand.vmem [shape: f32[2,1,32], index: 5, kind: input, shape index: {}]
  %s6 = inlined_call_operand.hbm [shape: f32[2,1,32], index: 6, kind: input, shape index: {}]
  %s7 = inlined_call_operand.hbm [shape: f32[2,1,32], index: 7, kind: input, shape index: {}]
  %s8 = inlined_call_operand.hbm [shape: bf16[2,32,64], index: 8, kind: input, shape index: {}]
  %s9 = inlined_call_operand.hbm [shape: f32[2,1,64], index: 9, kind: input, shape index: {}]
  %s10 = inlined_call_operand.vmem [shape: bf16[2,64,32], index: 10, kind: input, shape index: {}]
  %s11 = inlined_call_operand.vmem [shape: f32[2,1,32], index: 11, kind: input, shape index: {}]
  %s12 = inlined_call_operand.vmem [shape: f32[2,1,32], index: 12, kind: input, shape index: {}]
  %s13 = inlined_call_operand.vmem [shape: f32[2,1,32], index: 13, kind: input, shape index: {}]
  %s14 = inlined_call_operand.hbm [shape: f32[4,8,32], index: 14, kind: output, shape index: {}]
  %s15 = sld [smem:[#allocation0]]
  $region113: #{tpu_custom_call.1} parent=0
    _
  %s17 = ssub.s32 1, %s15
  %s18 = scalar_select 0, %s17, %s15
  $region1: #{tpu_custom_call.1} parent=0
    #allocation2 [shape = 'u8[16384]{0}', space=vmem, size = 0x4000, scoped, tag = 'input window, operand 4']
    #allocation3 [shape = 's32[2]{0}', space=sflag, size = 0x8, scoped, tag = 'scoped memory for tpu_custom_call.1']
    #allocation4 [shape = 's32[2]{0}', space=sflag, size = 0x8, scoped, tag = 'scoped memory for tpu_custom_call.1']
    #allocation5 [shape = 'u8[1024]{0}', space=vmem, size = 0x400, scoped, tag = 'input window, operand 6']
    #allocation6 [shape = 's32[2]{0}', space=sflag, size = 0x8, scoped, tag = 'scoped memory for tpu_custom_call.1']
    #allocation7 [shape = 'u8[1024]{0}', space=vmem, size = 0x400, scoped, tag = 'input window, operand 7']
    #allocation8 [shape = 'u8[16384]{0}', space=vmem, size = 0x4000, scoped, tag = 'input window, operand 8']
    #allocation9 [shape = 's32[2]{0}', space=sflag, size = 0x8, scoped, tag = 'scoped memory for tpu_custom_call.1']
    #allocation10 [shape = 'u8[1024]{0}', space=vmem, size = 0x400, scoped, tag = 'input window, operand 9']
    #allocation11 [shape = 'u8[16384]{0}', space=vmem, size = 0x4000, scoped, tag = 'output window, operand 0']
    %19 = vsyncpa [#allocation3], 0
    %s20 = scalar_lea.sflag [#allocation3], 1
    %21 = vsyncpa %s20, 0
    %22 = vsyncpa [#allocation6], 0
    %s23 = scalar_lea.sflag [#allocation6], 1
    %24 = vsyncpa %s23, 0
    %25 = vsyncpa [#allocation9], 0
    %s26 = scalar_lea.sflag [#allocation9], 1
    %27 = vsyncpa %s26, 0
    %28 = vsyncpa [#allocation4], 0
    %s29 = scalar_lea.sflag [#allocation4], 1
    %30 = vsyncpa %s29, 0
    loop: start=0, step=1, limit=6
    $region2: #{tpu_custom_call.1} parent=1 // loop_pre_header
      _
    $region3: #{tpu_custom_call.1} parent=1 // loop_header
      %s32 = sphi 0, %s36
      %p33 = scmp.ge.s32.totalorder %s32, 6
      %s39 = sphi 0, %s51
      %s40 = sphi 0, %s47
      %s41 = sphi 0, %s39
      %s42 = sphi 0, %s40
      %s43 = sphi 0, %s41
      %s44 = sphi 0, %s42
      %s54 = sphi 0, %s56
      %s57 = sphi 0, %s54
      %s58 = sphi 0, %s57
      %s74 = sphi 0, %s58
      %s80 = sphi 0, %s82
      %s83 = sphi 0, %s80
      %s84 = sphi 0, %s83
      %s100 = sphi 0, %s84
      %s106 = sphi 0, %s108
      %s109 = sphi 0, %s106
      %s110 = sphi 0, %s109
      %s126 = sphi 0, %s110
      %s132 = sphi 0, %s134
      %s135 = sphi 0, %s132
      %s136 = sphi 0, %s135
      %s152 = sphi 0, %s136
      %s158 = sphi 0, %s160
      %s161 = sphi 0, %s158
      %s162 = sphi 0, %s161
      %s178 = sphi 0, %s162
      %s184 = sphi 0, %s186
      %s187 = sphi 0, %s184
      %s188 = sphi 0, %s187
      %s204 = sphi 0, %s188
      %s210 = sphi 0, %s212
      %s213 = sphi 0, %s210
      %s214 = sphi 0, %s213
      %s230 = sphi 0, %s214
      %s236 = sphi 0, %s238
      %s239 = sphi 0, %s236
      %s240 = sphi 0, %s239
      %s256 = sphi 0, %s240
      %s262 = sphi 0, %s264
      %s265 = sphi 0, %s262
      %s266 = sphi 0, %s265
      %s282 = sphi 0, %s266
      %s288 = sphi 0, %s290
      %s291 = sphi 0, %s288
      %s292 = sphi 0, %s291
      %s308 = sphi 0, %s292
      %s314 = sphi 0, %s316
      %s317 = sphi 0, %s314
      %s318 = sphi 0, %s317
      %s334 = sphi 0, %s318
      %s340 = sphi 0, %s342
      %s343 = sphi 0, %s340
      %s344 = sphi 0, %s343
      %s360 = sphi 0, %s344
      %s366 = sphi 0, %s368
      %s369 = sphi 0, %s366
      %s370 = sphi 0, %s369
      %s386 = sphi 0, %s370
      %s392 = sphi 0, %s394
      %s395 = sphi 0, %s392
      %s396 = sphi 0, %s395
      %s412 = sphi 0, %s396
      %s418 = sphi 0, %s420
      %s421 = sphi 0, %s418
      %s422 = sphi 0, %s421
      %s438 = sphi 0, %s422
    $region4: #{tpu_custom_call.1} parent=1 // loop_header_branch
      %35 = sbr.rel (%p33) target = $region8
    $region5: #{tpu_custom_call.1} parent=1 // loop_body
      %s37 = ssub.s32 %s32, 1
      %s38 = ssub.s32 %s32, 2
      %s45 = sadd.s32 1, %s40
      %p46 = scmp.ge.s32.totalorder %s45, 2
      %s47 = scalar_select %p46, 0, %s45
      %s48 = sadd.s32 1, %s39
      %s49 = scalar_select %p46, %s48, %s39
      %p50 = scmp.ge.s32.totalorder %s49, 2
      %s51 = scalar_select %p50, 0, %s49
      %s52 = ssub.s32 %s39, %s51
      %p53 = scmp.eq.s32.totalorder %s52, 0
      %s55 = sadd.s32 %s54, 1
      %s56 = scalar_select %p53, %s54, %s55
      %p59 = pneg %p53
      %p60 = scmp.eq.s32.totalorder %s32, 3
      %p61 = por %p59, %p60
      %p62 = scmp.ne.s32.totalorder %s54, %s57
      %p63 = scmp.eq.s32.totalorder %s32, 0
      %p64 = por %p62, %p63
      %p65 = scmp.ne.s32.totalorder %s54, %s57
      %p66 = scmp.eq.s32.totalorder %s37, 3
      %p67 = por %p65, %p66
      %p68 = scmp.ne.s32.totalorder %s57, %s58
      %p69 = scmp.eq.s32.totalorder %s37, 0
      %p70 = por %p68, %p69
      %p71 = scmp.ne.s32.totalorder %s57, %s58
      %p72 = scmp.eq.s32.totalorder %s38, 3
      %p73 = por %p71, %p72
      %p75 = scmp.ne.s32.totalorder %s58, %s74
      %p76 = scmp.eq.s32.totalorder %s38, 0
      %p77 = por %p75, %p76
      %s78 = ssub.s32 %s39, %s51
      %p79 = scmp.eq.s32.totalorder %s78, 0
      %s81 = sadd.s32 %s80, 1
      %s82 = scalar_select %p79, %s80, %s81
      %p85 = pneg %p79
      %p86 = scmp.eq.s32.totalorder %s32, 3
      %p87 = por %p85, %p86
      %p88 = scmp.ne.s32.totalorder %s80, %s83
      %p89 = scmp.eq.s32.totalorder %s32, 0
      %p90 = por %p88, %p89
      %p91 = scmp.ne.s32.totalorder %s80, %s83
      %p92 = scmp.eq.s32.totalorder %s37, 3
      %p93 = por %p91, %p92
      %p94 = scmp.ne.s32.totalorder %s83, %s84
      %p95 = scmp.eq.s32.totalorder %s37, 0
      %p96 = por %p94, %p95
      %p97 = scmp.ne.s32.totalorder %s83, %s84
      %p98 = scmp.eq.s32.totalorder %s38, 3
      %p99 = por %p97, %p98
      %p101 = scmp.ne.s32.totalorder %s84, %s100
      %p102 = scmp.eq.s32.totalorder %s38, 0
      %p103 = por %p101, %p102
      %s104 = ssub.s32 %s40, %s47
      %p105 = scmp.eq.s32.totalorder %s104, 0
      %s107 = sadd.s32 %s106, 1
      %s108 = scalar_select %p105, %s106, %s107
      %p111 = pneg %p105
      %p112 = scmp.eq.s32.totalorder %s32, 3
      %p113 = por %p111, %p112
      %p114 = scmp.ne.s32.totalorder %s106, %s109
      %p115 = scmp.eq.s32.totalorder %s32, 0
      %p116 = por %p114, %p115
      %p117 = scmp.ne.s32.totalorder %s106, %s109
      %p118 = scmp.eq.s32.totalorder %s37, 3
      %p119 = por %p117, %p118
      %p120 = scmp.ne.s32.totalorder %s109, %s110
      %p121 = scmp.eq.s32.totalorder %s37, 0
      %p122 = por %p120, %p121
      %p123 = scmp.ne.s32.totalorder %s109, %s110
      %p124 = scmp.eq.s32.totalorder %s38, 3
      %p125 = por %p123, %p124
      %p127 = scmp.ne.s32.totalorder %s110, %s126
      %p128 = scmp.eq.s32.totalorder %s38, 0
      %p129 = por %p127, %p128
      %s130 = ssub.s32 %s40, %s47
      %p131 = scmp.eq.s32.totalorder %s130, 0
      %s133 = sadd.s32 %s132, 1
      %s134 = scalar_select %p131, %s132, %s133
      %p137 = pneg %p131
      %p138 = scmp.eq.s32.totalorder %s32, 3
      %p139 = por %p137, %p138
      %p140 = scmp.ne.s32.totalorder %s132, %s135
      %p141 = scmp.eq.s32.totalorder %s32, 0
      %p142 = por %p140, %p141
      %p143 = scmp.ne.s32.totalorder %s132, %s135
      %p144 = scmp.eq.s32.totalorder %s37, 3
      %p145 = por %p143, %p144
      %p146 = scmp.ne.s32.totalorder %s135, %s136
      %p147 = scmp.eq.s32.totalorder %s37, 0
      %p148 = por %p146, %p147
      %p149 = scmp.ne.s32.totalorder %s135, %s136
      %p150 = scmp.eq.s32.totalorder %s38, 3
      %p151 = por %p149, %p150
      %p153 = scmp.ne.s32.totalorder %s136, %s152
      %p154 = scmp.eq.s32.totalorder %s38, 0
      %p155 = por %p153, %p154
      %s156 = ssub.s32 %s40, %s47
      %p157 = scmp.eq.s32.totalorder %s156, 0
      %s159 = sadd.s32 %s158, 1
      %s160 = scalar_select %p157, %s158, %s159
      %p163 = pneg %p157
      %p164 = scmp.eq.s32.totalorder %s32, 3
      %p165 = por %p163, %p164
      %p166 = scmp.ne.s32.totalorder %s158, %s161
      %p167 = scmp.eq.s32.totalorder %s32, 0
      %p168 = por %p166, %p167
      %p169 = scmp.ne.s32.totalorder %s158, %s161
      %p170 = scmp.eq.s32.totalorder %s37, 3
      %p171 = por %p169, %p170
      %p172 = scmp.ne.s32.totalorder %s161, %s162
      %p173 = scmp.eq.s32.totalorder %s37, 0
      %p174 = por %p172, %p173
      %p175 = scmp.ne.s32.totalorder %s161, %s162
      %p176 = scmp.eq.s32.totalorder %s38, 3
      %p177 = por %p175, %p176
      %p179 = scmp.ne.s32.totalorder %s162, %s178
      %p180 = scmp.eq.s32.totalorder %s38, 0
      %p181 = por %p179, %p180
      %s182 = ssub.s32 %s40, %s47
      %p183 = scmp.eq.s32.totalorder %s182, 0
      %s185 = sadd.s32 %s184, 1
      %s186 = scalar_select %p183, %s184, %s185
      %p189 = pneg %p183
      %p190 = scmp.eq.s32.totalorder %s32, 3
      %p191 = por %p189, %p190
      %p192 = scmp.ne.s32.totalorder %s184, %s187
      %p193 = scmp.eq.s32.totalorder %s32, 0
      %p194 = por %p192, %p193
      %p195 = scmp.ne.s32.totalorder %s184, %s187
      %p196 = scmp.eq.s32.totalorder %s37, 3
      %p197 = por %p195, %p196
      %p198 = scmp.ne.s32.totalorder %s187, %s188
      %p199 = scmp.eq.s32.totalorder %s37, 0
      %p200 = por %p198, %p199
      %p201 = scmp.ne.s32.totalorder %s187, %s188
      %p202 = scmp.eq.s32.totalorder %s38, 3
      %p203 = por %p201, %p202
      %p205 = scmp.ne.s32.totalorder %s188, %s204
      %p206 = scmp.eq.s32.totalorder %s38, 0
      %p207 = por %p205, %p206
      %s208 = ssub.s32 %s40, %s47
      %p209 = scmp.eq.s32.totalorder %s208, 0
      %s211 = sadd.s32 %s210, 1
      %s212 = scalar_select %p209, %s210, %s211
      %p215 = pneg %p209
      %p216 = scmp.eq.s32.totalorder %s32, 3
      %p217 = por %p215, %p216
      %p218 = scmp.ne.s32.totalorder %s210, %s213
      %p219 = scmp.eq.s32.totalorder %s32, 0
      %p220 = por %p218, %p219
      %p221 = scmp.ne.s32.totalorder %s210, %s213
      %p222 = scmp.eq.s32.totalorder %s37, 3
      %p223 = por %p221, %p222
      %p224 = scmp.ne.s32.totalorder %s213, %s214
      %p225 = scmp.eq.s32.totalorder %s37, 0
      %p226 = por %p224, %p225
      %p227 = scmp.ne.s32.totalorder %s213, %s214
      %p228 = scmp.eq.s32.totalorder %s38, 3
      %p229 = por %p227, %p228
      %p231 = scmp.ne.s32.totalorder %s214, %s230
      %p232 = scmp.eq.s32.totalorder %s38, 0
      %p233 = por %p231, %p232
      %s234 = ssub.s32 %s40, %s47
      %p235 = scmp.eq.s32.totalorder %s234, 0
      %s237 = sadd.s32 %s236, 1
      %s238 = scalar_select %p235, %s236, %s237
      %p241 = pneg %p235
      %p242 = scmp.eq.s32.totalorder %s32, 3
      %p243 = por %p241, %p242
      %p244 = scmp.ne.s32.totalorder %s236, %s239
      %p245 = scmp.eq.s32.totalorder %s32, 0
      %p246 = por %p244, %p245
      %p247 = scmp.ne.s32.totalorder %s236, %s239
      %p248 = scmp.eq.s32.totalorder %s37, 3
      %p249 = por %p247, %p248
      %p250 = scmp.ne.s32.totalorder %s239, %s240
      %p251 = scmp.eq.s32.totalorder %s37, 0
      %p252 = por %p250, %p251
      %p253 = scmp.ne.s32.totalorder %s239, %s240
      %p254 = scmp.eq.s32.totalorder %s38, 3
      %p255 = por %p253, %p254
      %p257 = scmp.ne.s32.totalorder %s240, %s256
      %p258 = scmp.eq.s32.totalorder %s38, 0
      %p259 = por %p257, %p258
      %s260 = ssub.s32 %s40, %s47
      %p261 = scmp.eq.s32.totalorder %s260, 0
      %s263 = sadd.s32 %s262, 1
      %s264 = scalar_select %p261, %s262, %s263
      %p267 = pneg %p261
      %p268 = scmp.eq.s32.totalorder %s32, 3
      %p269 = por %p267, %p268
      %p270 = scmp.ne.s32.totalorder %s262, %s265
      %p271 = scmp.eq.s32.totalorder %s32, 0
      %p272 = por %p270, %p271
      %p273 = scmp.ne.s32.totalorder %s262, %s265
      %p274 = scmp.eq.s32.totalorder %s37, 3
      %p275 = por %p273, %p274
      %p276 = scmp.ne.s32.totalorder %s265, %s266
      %p277 = scmp.eq.s32.totalorder %s37, 0
      %p278 = por %p276, %p277
      %p279 = scmp.ne.s32.totalorder %s265, %s266
      %p280 = scmp.eq.s32.totalorder %s38, 3
      %p281 = por %p279, %p280
      %p283 = scmp.ne.s32.totalorder %s266, %s282
      %p284 = scmp.eq.s32.totalorder %s38, 0
      %p285 = por %p283, %p284
      %s286 = ssub.s32 %s40, %s47
      %p287 = scmp.eq.s32.totalorder %s286, 0
      %s289 = sadd.s32 %s288, 1
      %s290 = scalar_select %p287, %s288, %s289
      %p293 = pneg %p287
      %p294 = scmp.eq.s32.totalorder %s32, 3
      %p295 = por %p293, %p294
      %p296 = scmp.ne.s32.totalorder %s288, %s291
      %p297 = scmp.eq.s32.totalorder %s32, 0
      %p298 = por %p296, %p297
      %p299 = scmp.ne.s32.totalorder %s288, %s291
      %p300 = scmp.eq.s32.totalorder %s37, 3
      %p301 = por %p299, %p300
      %p302 = scmp.ne.s32.totalorder %s291, %s292
      %p303 = scmp.eq.s32.totalorder %s37, 0
      %p304 = por %p302, %p303
      %p305 = scmp.ne.s32.totalorder %s291, %s292
      %p306 = scmp.eq.s32.totalorder %s38, 3
      %p307 = por %p305, %p306
      %p309 = scmp.ne.s32.totalorder %s292, %s308
      %p310 = scmp.eq.s32.totalorder %s38, 0
      %p311 = por %p309, %p310
      %s312 = ssub.s32 %s40, %s47
      %p313 = scmp.eq.s32.totalorder %s312, 0
      %s315 = sadd.s32 %s314, 1
      %s316 = scalar_select %p313, %s314, %s315
      %p319 = pneg %p313
      %p320 = scmp.eq.s32.totalorder %s32, 3
      %p321 = por %p319, %p320
      %p322 = scmp.ne.s32.totalorder %s314, %s317
      %p323 = scmp.eq.s32.totalorder %s32, 0
      %p324 = por %p322, %p323
      %p325 = scmp.ne.s32.totalorder %s314, %s317
      %p326 = scmp.eq.s32.totalorder %s37, 3
      %p327 = por %p325, %p326
      %p328 = scmp.ne.s32.totalorder %s317, %s318
      %p329 = scmp.eq.s32.totalorder %s37, 0
      %p330 = por %p328, %p329
      %p331 = scmp.ne.s32.totalorder %s317, %s318
      %p332 = scmp.eq.s32.totalorder %s38, 3
      %p333 = por %p331, %p332
      %p335 = scmp.ne.s32.totalorder %s318, %s334
      %p336 = scmp.eq.s32.totalorder %s38, 0
      %p337 = por %p335, %p336
      %s338 = ssub.s32 %s40, %s47
      %p339 = scmp.eq.s32.totalorder %s338, 0
      %s341 = sadd.s32 %s340, 1
      %s342 = scalar_select %p339, %s340, %s341
      %p345 = pneg %p339
      %p346 = scmp.eq.s32.totalorder %s32, 3
      %p347 = por %p345, %p346
      %p348 = scmp.ne.s32.totalorder %s340, %s343
      %p349 = scmp.eq.s32.totalorder %s32, 0
      %p350 = por %p348, %p349
      %p351 = scmp.ne.s32.totalorder %s340, %s343
      %p352 = scmp.eq.s32.totalorder %s37, 3
      %p353 = por %p351, %p352
      %p354 = scmp.ne.s32.totalorder %s343, %s344
      %p355 = scmp.eq.s32.totalorder %s37, 0
      %p356 = por %p354, %p355
      %p357 = scmp.ne.s32.totalorder %s343, %s344
      %p358 = scmp.eq.s32.totalorder %s38, 3
      %p359 = por %p357, %p358
      %p361 = scmp.ne.s32.totalorder %s344, %s360
      %p362 = scmp.eq.s32.totalorder %s38, 0
      %p363 = por %p361, %p362
      %s364 = ssub.s32 %s40, %s47
      %p365 = scmp.eq.s32.totalorder %s364, 0
      %s367 = sadd.s32 %s366, 1
      %s368 = scalar_select %p365, %s366, %s367
      %p371 = pneg %p365
      %p372 = scmp.eq.s32.totalorder %s32, 3
      %p373 = por %p371, %p372
      %p374 = scmp.ne.s32.totalorder %s366, %s369
      %p375 = scmp.eq.s32.totalorder %s32, 0
      %p376 = por %p374, %p375
      %p377 = scmp.ne.s32.totalorder %s366, %s369
      %p378 = scmp.eq.s32.totalorder %s37, 3
      %p379 = por %p377, %p378
      %p380 = scmp.ne.s32.totalorder %s369, %s370
      %p381 = scmp.eq.s32.totalorder %s37, 0
      %p382 = por %p380, %p381
      %p383 = scmp.ne.s32.totalorder %s369, %s370
      %p384 = scmp.eq.s32.totalorder %s38, 3
      %p385 = por %p383, %p384
      %p387 = scmp.ne.s32.totalorder %s370, %s386
      %p388 = scmp.eq.s32.totalorder %s38, 0
      %p389 = por %p387, %p388
      %s390 = ssub.s32 %s40, %s47
      %p391 = scmp.eq.s32.totalorder %s390, 0
      %s393 = sadd.s32 %s392, 1
      %s394 = scalar_select %p391, %s392, %s393
      %p397 = pneg %p391
      %p398 = scmp.eq.s32.totalorder %s32, 3
      %p399 = por %p397, %p398
      %p400 = scmp.ne.s32.totalorder %s392, %s395
      %p401 = scmp.eq.s32.totalorder %s32, 0
      %p402 = por %p400, %p401
      %p403 = scmp.ne.s32.totalorder %s392, %s395
      %p404 = scmp.eq.s32.totalorder %s37, 3
      %p405 = por %p403, %p404
      %p406 = scmp.ne.s32.totalorder %s395, %s396
      %p407 = scmp.eq.s32.totalorder %s37, 0
      %p408 = por %p406, %p407
      %p409 = scmp.ne.s32.totalorder %s395, %s396
      %p410 = scmp.eq.s32.totalorder %s38, 3
      %p411 = por %p409, %p410
      %p413 = scmp.ne.s32.totalorder %s396, %s412
      %p414 = scmp.eq.s32.totalorder %s38, 0
      %p415 = por %p413, %p414
      %s416 = ssub.s32 %s39, %s51
      %p417 = scmp.eq.s32.totalorder %s416, 0
      %s419 = sadd.s32 %s418, 1
      %s420 = scalar_select %p417, %s418, %s419
      %p423 = pneg %p417
      %p424 = scmp.eq.s32.totalorder %s32, 3
      %p425 = por %p423, %p424
      %p426 = scmp.ne.s32.totalorder %s418, %s421
      %p427 = scmp.eq.s32.totalorder %s32, 0
      %p428 = por %p426, %p427
      %p429 = scmp.ne.s32.totalorder %s418, %s421
      %p430 = scmp.eq.s32.totalorder %s37, 3
      %p431 = por %p429, %p430
      %p432 = scmp.ne.s32.totalorder %s421, %s422
      %p433 = scmp.eq.s32.totalorder %s37, 0
      %p434 = por %p432, %p433
      %p435 = scmp.ne.s32.totalorder %s421, %s422
      %p436 = scmp.eq.s32.totalorder %s38, 3
      %p437 = por %p435, %p436
      %p439 = scmp.ne.s32.totalorder %s422, %s438
      %p440 = scmp.eq.s32.totalorder %s38, 0
      %p441 = por %p439, %p440
      %p442 = scmp.le.s32.totalorder 1, %s32
      %p443 = scmp.lt.s32.totalorder %s32, 5
      %p444 = pnand %p442, %p443
      %p445 = pneg %p444
      // Predicated region
      $region9: #{tpu_custom_call.1} parent=5 // pred_check
        _
      $region10: #{tpu_custom_call.1} parent=5 // pred_check_branch
        %447 = sbr.rel (%p444) target = $region12
      $region11: #{tpu_custom_call.1} parent=5 // pred_region
        %s448 = ssub.s32 %s32, 1
      $region12: #{tpu_custom_call.1} parent=5 // pred_fallthru
        _
      %p449 = scmp.lt.s32.totalorder %s32, 4
      // Predicated region
      $region13: #{tpu_custom_call.1} parent=5 // pred_check
        %p450 = pneg %p449
      $region14: #{tpu_custom_call.1} parent=5 // pred_check_branch
        %452 = sbr.rel (%p450) target = $region16
      $region15: #{tpu_custom_call.1} parent=5 // pred_region
        // Predicated region
        $region17: #{tpu_custom_call.1} parent=15 // pred_check
          %p453 = pneg %p64
        $region18: #{tpu_custom_call.1} parent=15 // pred_check_branch
          %455 = sbr.rel (%p453) target = $region20
        $region19: #{tpu_custom_call.1} parent=15 // pred_region
          %s456 = smul.u32 2, %s39
          %p457 = scmp.lt.s32.totalorder %s456, 3
          %s458 = scalar_select %p457, %s456, 3
          %s459 = smul.addr %s458, 8
          %s460 = scalar_lea.vmem %s0, %s459
          %s461 = smul.u32 2, %s39
        $region20: #{tpu_custom_call.1} parent=15 // pred_fallthru
          _
        // Predicated region
        $region21: #{tpu_custom_call.1} parent=15 // pred_check
          %p462 = pneg %p90
        $region22: #{tpu_custom_call.1} parent=15 // pred_check_branch
          %464 = sbr.rel (%p462) target = $region24
        $region23: #{tpu_custom_call.1} parent=15 // pred_region
          %s465 = smul.u32 2, %s39
          %p466 = scmp.lt.s32.totalorder %s465, 3
          %s467 = scalar_select %p466, %s465, 3
          %s468 = smul.addr %s467, 8
          %s469 = scalar_lea.vmem %s1, %s468
          %s470 = smul.u32 2, %s39
        $region24: #{tpu_custom_call.1} parent=15 // pred_fallthru
          _
        // Predicated region
        $region25: #{tpu_custom_call.1} parent=15 // pred_check
          %p471 = pneg %p116
        $region26: #{tpu_custom_call.1} parent=15 // pred_check_branch
          %473 = sbr.rel (%p471) target = $region28
        $region27: #{tpu_custom_call.1} parent=15 // pred_region
          %p474 = scmp.lt.s32.totalorder %s40, 1
          %s475 = scalar_select %p474, %s40, 1
          %s476 = smul.addr %s475, 4
          %s477 = smul.addr %s476, 4
          %s478 = scalar_lea.vmem %s2, %s477
        $region28: #{tpu_custom_call.1} parent=15 // pred_fallthru
          _
        // Predicated region
        $region29: #{tpu_custom_call.1} parent=15 // pred_check
          %p479 = pneg %p142
        $region30: #{tpu_custom_call.1} parent=15 // pred_check_branch
          %481 = sbr.rel (%p479) target = $region32
        $region31: #{tpu_custom_call.1} parent=15 // pred_region
          %p482 = scmp.lt.s32.totalorder %s40, 1
          %s483 = scalar_select %p482, %s40, 1
          %s484 = scalar_lea.vmem %s3, %s483
        $region32: #{tpu_custom_call.1} parent=15 // pred_fallthru
          _
        // Predicated region
        $region33: #{tpu_custom_call.1} parent=15 // pred_check
          %p485 = pneg %p168
        $region34: #{tpu_custom_call.1} parent=15 // pred_check_branch
          %487 = sbr.rel (%p485) target = $region36
        $region35: #{tpu_custom_call.1} parent=15 // pred_region
          %s488 = sand.u32 %s158, 1
          %s489 = scalar_lea.sflag [#allocation3], %s488
          %s490 = sand.u32 %s158, 1
          %s491 = smul.addr %s490, 16
          %s492 = scalar_lea.vmem [#allocation2], %s491
          %s494 = ssub.s32 256, 256
          %495 = vsyncadd %s489, %s494
          %s496 = smul.addr %s40, 4
          %s497 = smul.addr %s496, 64
          %s498 = scalar_lea.hbm %s4, %s497
          %s499 = sshll.u32 %s492, 4
          %s500 = int_to_ptr.vmem [resolvable:$true] %s499
          %505 = dma.hbm_to_vmem [thread:$0]  %s498, 256, %s500, %s489, 64, 64, 4
        $region36: #{tpu_custom_call.1} parent=15 // pred_fallthru
          _
        // Predicated region
        $region37: #{tpu_custom_call.1} parent=15 // pred_check
          %p506 = pneg %p194
        $region38: #{tpu_custom_call.1} parent=15 // pred_check_branch
          %508 = sbr.rel (%p506) target = $region40
        $region39: #{tpu_custom_call.1} parent=15 // pred_region
          %p509 = scmp.lt.s32.totalorder %s40, 1
          %s510 = scalar_select %p509, %s40, 1
          %s511 = scalar_lea.vmem %s5, %s510
        $region40: #{tpu_custom_call.1} parent=15 // pred_fallthru
          _
        // Predicated region
        $region41: #{tpu_custom_call.1} parent=15 // pred_check
          %p512 = pneg %p220
        $region42: #{tpu_custom_call.1} parent=15 // pred_check_branch
          %514 = sbr.rel (%p512) target = $region44
        $region43: #{tpu_custom_call.1} parent=15 // pred_region
          %s515 = sand.u32 %s32, 1
          %s516 = scalar_lea.sflag [#allocation6], %s515
          %s517 = sand.u32 %s210, 1
          %s518 = scalar_lea.vmem [#allocation5], %s517
          %s520 = ssub.s32 16, 16
          %521 = vsyncadd %s516, %s520
          %s522 = smul.addr %s40, 16
          %s523 = scalar_lea.hbm %s6, %s522
          %s525 = sshll.u32 %s518, 4
          %s526 = int_to_ptr.vmem [resolvable:$true] %s525
          %528 = dma.hbm_to_vmem [thread:$0]  %s523, 16, %s526, %s516
        $region44: #{tpu_custom_call.1} parent=15 // pred_fallthru
          _
        // Predicated region
        $region45: #{tpu_custom_call.1} parent=15 // pred_check
          %p529 = pneg %p246
        $region46: #{tpu_custom_call.1} parent=15 // pred_check_branch
          %531 = sbr.rel (%p529) target = $region48
        $region47: #{tpu_custom_call.1} parent=15 // pred_region
          %s532 = sand.u32 %s32, 1
          %s533 = scalar_lea.sflag [#allocation6], %s532
          %s534 = sand.u32 %s236, 1
          %s535 = scalar_lea.vmem [#allocation7], %s534
          %s537 = ssub.s32 16, 16
          %538 = vsyncadd %s533, %s537
          %s539 = smul.addr %s40, 16
          %s540 = scalar_lea.hbm %s7, %s539
          %s542 = sshll.u32 %s535, 4
          %s543 = int_to_ptr.vmem [resolvable:$true] %s542
          %545 = dma.hbm_to_vmem [thread:$0]  %s540, 16, %s543, %s533
        $region48: #{tpu_custom_call.1} parent=15 // pred_fallthru
          _
        // Predicated region
        $region49: #{tpu_custom_call.1} parent=15 // pred_check
          %p546 = pneg %p272
        $region50: #{tpu_custom_call.1} parent=15 // pred_check_branch
          %548 = sbr.rel (%p546) target = $region52
        $region51: #{tpu_custom_call.1} parent=15 // pred_region
          %s549 = sand.u32 %s32, 1
          %s550 = scalar_lea.sflag [#allocation9], %s549
          %s551 = sand.u32 %s262, 1
          %s552 = smul.addr %s551, 16
          %s553 = scalar_lea.vmem [#allocation8], %s552
          %s555 = ssub.s32 256, 256
          %556 = vsyncadd %s550, %s555
          %s557 = smul.addr %s40, 4
          %s558 = smul.addr %s557, 64
          %s559 = scalar_lea.hbm %s8, %s558
          %s560 = sshll.u32 %s553, 4
          %s561 = int_to_ptr.vmem [resolvable:$true] %s560
          %566 = dma.hbm_to_vmem [thread:$0]  %s559, 256, %s561, %s550, 64, 64, 4
        $region52: #{tpu_custom_call.1} parent=15 // pred_fallthru
          _
        // Predicated region
        $region53: #{tpu_custom_call.1} parent=15 // pred_check
          %p567 = pneg %p298
        $region54: #{tpu_custom_call.1} parent=15 // pred_check_branch
          %569 = sbr.rel (%p567) target = $region56
        $region55: #{tpu_custom_call.1} parent=15 // pred_region
          %s570 = sand.u32 %s32, 1
          %s571 = scalar_lea.sflag [#allocation9], %s570
          %s572 = sand.u32 %s288, 1
          %s573 = scalar_lea.vmem [#allocation10], %s572
          %s575 = ssub.s32 16, 16
          %576 = vsyncadd %s571, %s575
          %s577 = smul.addr %s40, 16
          %s578 = scalar_lea.hbm %s9, %s577
          %s580 = sshll.u32 %s573, 4
          %s581 = int_to_ptr.vmem [resolvable:$true] %s580
          %583 = dma.hbm_to_vmem [thread:$0]  %s578, 16, %s581, %s571
        $region56: #{tpu_custom_call.1} parent=15 // pred_fallthru
          _
        // Predicated region
        $region57: #{tpu_custom_call.1} parent=15 // pred_check
          %p584 = pneg %p324
        $region58: #{tpu_custom_call.1} parent=15 // pred_check_branch
          %586 = sbr.rel (%p584) target = $region60
        $region59: #{tpu_custom_call.1} parent=15 // pred_region
          %p587 = scmp.lt.s32.totalorder %s40, 1
          %s588 = scalar_select %p587, %s40, 1
          %s589 = smul.addr %s588, 8
          %s590 = smul.addr %s589, 4
          %s591 = scalar_lea.vmem %s10, %s590
        $region60: #{tpu_custom_call.1} parent=15 // pred_fallthru
          _
        // Predicated region
        $region61: #{tpu_custom_call.1} parent=15 // pred_check
          %p592 = pneg %p350
        $region62: #{tpu_custom_call.1} parent=15 // pred_check_branch
          %594 = sbr.rel (%p592) target = $region64
        $region63: #{tpu_custom_call.1} parent=15 // pred_region
          %p595 = scmp.lt.s32.totalorder %s40, 1
          %s596 = scalar_select %p595, %s40, 1
          %s597 = scalar_lea.vmem %s11, %s596
        $region64: #{tpu_custom_call.1} parent=15 // pred_fallthru
          _
        // Predicated region
        $region65: #{tpu_custom_call.1} parent=15 // pred_check
          %p598 = pneg %p376
        $region66: #{tpu_custom_call.1} parent=15 // pred_check_branch
          %600 = sbr.rel (%p598) target = $region68
        $region67: #{tpu_custom_call.1} parent=15 // pred_region
          %p601 = scmp.lt.s32.totalorder %s40, 1
          %s602 = scalar_select %p601, %s40, 1
          %s603 = scalar_lea.vmem %s12, %s602
        $region68: #{tpu_custom_call.1} parent=15 // pred_fallthru
          _
        // Predicated region
        $region69: #{tpu_custom_call.1} parent=15 // pred_check
          %p604 = pneg %p402
        $region70: #{tpu_custom_call.1} parent=15 // pred_check_branch
          %606 = sbr.rel (%p604) target = $region72
        $region71: #{tpu_custom_call.1} parent=15 // pred_region
          %p607 = scmp.lt.s32.totalorder %s40, 1
          %s608 = scalar_select %p607, %s40, 1
          %s609 = scalar_lea.vmem %s13, %s608
        $region72: #{tpu_custom_call.1} parent=15 // pred_fallthru
          _
      $region16: #{tpu_custom_call.1} parent=5 // pred_fallthru
        _
      %p610 = scmp.le.s32.totalorder 1, %s32
      %p611 = scmp.lt.s32.totalorder %s32, 5
      %p612 = pnand %p610, %p611
      %p613 = pneg %p612
      // Predicated region
      $region73: #{tpu_custom_call.1} parent=5 // pred_check
        _
      $region74: #{tpu_custom_call.1} parent=5 // pred_check_branch
        %615 = sbr.rel (%p612) target = $region76
      $region75: #{tpu_custom_call.1} parent=5 // pred_region
        %s616 = ssub.s32 %s32, 1
        %s617 = sand.u32 %s161, 1
        %s618 = scalar_lea.sflag [#allocation3], %s617
        %s619 = sand.u32 %s161, 1
        %s620 = smul.addr %s619, 16
        %s621 = scalar_lea.vmem [#allocation2], %s620
        // Predicated region
        $region77: #{tpu_custom_call.1} parent=75 // pred_check
          %p622 = pneg %p174
        $region78: #{tpu_custom_call.1} parent=75 // pred_check_branch
          %624 = sbr.rel (%p622) target = $region80
        $region79: #{tpu_custom_call.1} parent=75 // pred_region
          %625 = dma.done %s618, 256
        $region80: #{tpu_custom_call.1} parent=75 // pred_fallthru
          _
        %s626 = sand.u32 %s37, 1
        %s627 = scalar_lea.sflag [#allocation6], %s626
        %s628 = sand.u32 %s213, 1
        %s629 = scalar_lea.vmem [#allocation5], %s628
        // Predicated region
        $region81: #{tpu_custom_call.1} parent=75 // pred_check
          %p630 = pneg %p226
        $region82: #{tpu_custom_call.1} parent=75 // pred_check_branch
          %632 = sbr.rel (%p630) target = $region84
        $region83: #{tpu_custom_call.1} parent=75 // pred_region
          %633 = dma.done %s627, 16
        $region84: #{tpu_custom_call.1} parent=75 // pred_fallthru
          _
        %s634 = sand.u32 %s37, 1
        %s635 = scalar_lea.sflag [#allocation6], %s634
        %s636 = sand.u32 %s239, 1
        %s637 = scalar_lea.vmem [#allocation7], %s636
        // Predicated region
        $region85: #{tpu_custom_call.1} parent=75 // pred_check
          %p638 = pneg %p252
        $region86: #{tpu_custom_call.1} parent=75 // pred_check_branch
          %640 = sbr.rel (%p638) target = $region88
        $region87: #{tpu_custom_call.1} parent=75 // pred_region
          %641 = dma.done %s635, 16
        $region88: #{tpu_custom_call.1} parent=75 // pred_fallthru
          _
        %s642 = sand.u32 %s37, 1
        %s643 = scalar_lea.sflag [#allocation9], %s642
        %s644 = sand.u32 %s265, 1
        %s645 = smul.addr %s644, 16
        %s646 = scalar_lea.vmem [#allocation8], %s645
        // Predicated region
        $region89: #{tpu_custom_call.1} parent=75 // pred_check
          %p647 = pneg %p278
        $region90: #{tpu_custom_call.1} parent=75 // pred_check_branch
          %649 = sbr.rel (%p647) target = $region92
        $region91: #{tpu_custom_call.1} parent=75 // pred_region
          %650 = dma.done %s643, 256
        $region92: #{tpu_custom_call.1} parent=75 // pred_fallthru
          _
        %s651 = sand.u32 %s37, 1
        %s652 = scalar_lea.sflag [#allocation9], %s651
        %s653 = sand.u32 %s291, 1
        %s654 = scalar_lea.vmem [#allocation10], %s653
        // Predicated region
        $region93: #{tpu_custom_call.1} parent=75 // pred_check
          %p655 = pneg %p304
        $region94: #{tpu_custom_call.1} parent=75 // pred_check_branch
          %657 = sbr.rel (%p655) target = $region96
        $region95: #{tpu_custom_call.1} parent=75 // pred_region
          %658 = dma.done %s652, 16
        $region96: #{tpu_custom_call.1} parent=75 // pred_fallthru
          _
        %s659 = smul.u32 2, %s41
        %p660 = scmp.lt.s32.totalorder %s659, 3
        %s661 = scalar_select %p660, %s659, 3
        %s662 = smul.addr %s661, 8
        %s663 = scalar_lea.vmem %s0, %s662
        %p664 = pneg %p70
        %p665 = pneg %p67
        %s666 = smul.u32 2, %s41
        %p667 = scmp.lt.s32.totalorder %s666, 3
        %s668 = scalar_select %p667, %s666, 3
        %s669 = smul.addr %s668, 8
        %s670 = scalar_lea.vmem %s1, %s669
        %p671 = pneg %p96
        %p672 = pneg %p93
        %p673 = scmp.lt.s32.totalorder %s42, 1
        %s674 = scalar_select %p673, %s42, 1
        %s675 = smul.addr %s674, 4
        %s676 = smul.addr %s675, 4
        %s677 = scalar_lea.vmem %s2, %s676
        %p678 = pneg %p122
        %p679 = pneg %p119
        %p680 = scmp.lt.s32.totalorder %s42, 1
        %s681 = scalar_select %p680, %s42, 1
        %s682 = scalar_lea.vmem %s3, %s681
        %p683 = pneg %p148
        %p684 = pneg %p145
        %s685 = sand.u32 %s161, 1
        %s686 = scalar_lea.sflag [#allocation3], %s685
        %s687 = sand.u32 %s161, 1
        %s688 = smul.addr %s687, 16
        %s689 = scalar_lea.vmem [#allocation2], %s688
        %p690 = pneg %p174
        %p691 = pneg %p171
        %p692 = scmp.lt.s32.totalorder %s42, 1
        %s693 = scalar_select %p692, %s42, 1
        %s694 = scalar_lea.vmem %s5, %s693
        %p695 = pneg %p200
        %p696 = pneg %p197
        %s697 = sand.u32 %s37, 1
        %s698 = scalar_lea.sflag [#allocation6], %s697
        %s699 = sand.u32 %s213, 1
        %s700 = scalar_lea.vmem [#allocation5], %s699
        %p701 = pneg %p226
        %p702 = pneg %p223
        %s703 = sand.u32 %s37, 1
        %s704 = scalar_lea.sflag [#allocation6], %s703
        %s705 = sand.u32 %s239, 1
        %s706 = scalar_lea.vmem [#allocation7], %s705
        %p707 = pneg %p252
        %p708 = pneg %p249
        %s709 = sand.u32 %s37, 1
        %s710 = scalar_lea.sflag [#allocation9], %s709
        %s711 = sand.u32 %s265, 1
        %s712 = smul.addr %s711, 16
        %s713 = scalar_lea.vmem [#allocation8], %s712
        %p714 = pneg %p278
        %p715 = pneg %p275
        %s716 = sand.u32 %s37, 1
        %s717 = scalar_lea.sflag [#allocation9], %s716
        %s718 = sand.u32 %s291, 1
        %s719 = scalar_lea.vmem [#allocation10], %s718
        %p720 = pneg %p304
        %p721 = pneg %p301
        %p722 = scmp.lt.s32.totalorder %s42, 1
        %s723 = scalar_select %p722, %s42, 1
        %s724 = smul.addr %s723, 8
        %s725 = smul.addr %s724, 4
        %s726 = scalar_lea.vmem %s10, %s725
        %p727 = pneg %p330
        %p728 = pneg %p327
        %p729 = scmp.lt.s32.totalorder %s42, 1
        %s730 = scalar_select %p729, %s42, 1
        %s731 = scalar_lea.vmem %s11, %s730
        %p732 = pneg %p356
        %p733 = pneg %p353
        %p734 = scmp.lt.s32.totalorder %s42, 1
        %s735 = scalar_select %p734, %s42, 1
        %s736 = scalar_lea.vmem %s12, %s735
        %p737 = pneg %p382
        %p738 = pneg %p379
        %p739 = scmp.lt.s32.totalorder %s42, 1
        %s740 = scalar_select %p739, %s42, 1
        %s741 = scalar_lea.vmem %s13, %s740
        %p742 = pneg %p408
        %p743 = pneg %p405
        %p744 = pneg %p434
        %p745 = pneg %p431
        %s746 = sand.u32 %s421, 1
        %s747 = scalar_lea.sflag [#allocation4], %s746
        %s748 = sand.u32 %s421, 1
        %s749 = smul.addr %s748, 16
        %s750 = scalar_lea.vmem [#allocation11], %s749
        %s751 = smul.u32 2, %s41
        %p752 = scmp.lt.s32.totalorder %s751, 3
        %s753 = scalar_select %p752, %s751, 3
        %s754 = smul.addr %s753, 8
        %s755 = scalar_lea.vmem %s0, %s754
        %s756 = smul.u32 2, %s41
        %s757 = smul.u32 2, %s41
        %p758 = scmp.lt.s32.totalorder %s757, 3
        %s759 = scalar_select %p758, %s757, 3
        %s760 = smul.addr %s759, 8
        %s761 = scalar_lea.vmem %s1, %s760
        %s762 = smul.u32 2, %s41
        %p763 = scmp.lt.s32.totalorder %s42, 1
        %s764 = scalar_select %p763, %s42, 1
        %s765 = smul.addr %s764, 4
        %s766 = smul.addr %s765, 4
        %s767 = scalar_lea.vmem %s2, %s766
        %p768 = scmp.lt.s32.totalorder %s42, 1
        %s769 = scalar_select %p768, %s42, 1
        %s770 = scalar_lea.vmem %s3, %s769
        %p771 = scmp.lt.s32.totalorder %s42, 1
        %s772 = scalar_select %p771, %s42, 1
        %s773 = scalar_lea.vmem %s5, %s772
        %p774 = scmp.lt.s32.totalorder %s42, 1
        %s775 = scalar_select %p774, %s42, 1
        %s776 = smul.addr %s775, 8
        %s777 = smul.addr %s776, 4
        %s778 = scalar_lea.vmem %s10, %s777
        %p779 = scmp.lt.s32.totalorder %s42, 1
        %s780 = scalar_select %p779, %s42, 1
        %s781 = scalar_lea.vmem %s11, %s780
        %p782 = scmp.lt.s32.totalorder %s42, 1
        %s783 = scalar_select %p782, %s42, 1
        %s784 = scalar_lea.vmem %s12, %s783
        %p785 = scmp.lt.s32.totalorder %s42, 1
        %s786 = scalar_select %p785, %s42, 1
        %s787 = scalar_lea.vmem %s13, %s786
        %s788 = smul.u32 2, %s41
        %p790 = scmp.eq.s32.totalorder %s42, 0
        // Predicated region
        $region97: #{tpu_custom_call.1} parent=75 // pred_check
          %p791 = pneg %p790
        $region98: #{tpu_custom_call.1} parent=75 // pred_check_branch
          %793 = sbr.rel (%p791) target = $region100
        $region99: #{tpu_custom_call.1} parent=75 // pred_region
          %v794 = vld [vmem:[%s755] sm:$0xff]
          %v795 = vld [vmem:[%s755 + $0x8] sm:$0xff]
          %vm796 = vcmask 261120
          %797 = vst.msk [vmem:[%s750] sm:$0xff] %vm796, %v794
          %798 = vst.msk [vmem:[%s750 + $0x8] sm:$0xff] %vm796, %v795
        $region100: #{tpu_custom_call.1} parent=75 // pred_fallthru
          _
        %v799 = vld [vmem:[%s750] sm:$0xff]
        %v800 = vld [vmem:[%s750 + $0x8] sm:$0xff]
        %v801 = vld [vmem:[%s761] sm:$0xff]
        %v802 = vld [vmem:[%s761 + $0x8] sm:$0xff]
        %v803 = vld [vmem:[%s767] sm:$0xf]
        %v804 = vld [vmem:[%s767 + $0x4] sm:$0xf]
        %v805 = vld [vmem:[%s767 + $0x8] sm:$0xf]
        %v806 = vld [vmem:[%s767 + $0xc] sm:$0xf]
        %v807 = vld [vmem:[%s770] sm:$0x1]
        %v808 = vld [vmem:[%s621] sm:$0xf]
        %v809 = vld [vmem:[%s621 + $0x4] sm:$0xf]
        %v810 = vld [vmem:[%s621 + $0x8] sm:$0xf]
        %v811 = vld [vmem:[%s621 + $0xc] sm:$0xf]
        %v812 = vld [vmem:[%s773] sm:$0x1]
        %v813 = vld [vmem:[%s629] sm:$0x1]
        %v814 = vld [vmem:[%s637] sm:$0x1]
        %v815 = vld [vmem:[%s646] sm:$0xf]
        %v816 = vld [vmem:[%s646 + $0x4] sm:$0xf]
        %v817 = vld [vmem:[%s646 + $0x8] sm:$0xf]
        %v818 = vld [vmem:[%s646 + $0xc] sm:$0xf]
        %v819 = vld [vmem:[%s654] sm:$0x1]
        %v820 = vld [vmem:[%s778] sm:$0xf]
        %v821 = vld [vmem:[%s778 + $0x4] sm:$0xf]
        %v822 = vld [vmem:[%s778 + $0x8] sm:$0xf]
        %v823 = vld [vmem:[%s778 + $0xc] sm:$0xf]
        %v824 = vld [vmem:[%s778 + $0x10] sm:$0xf]
        %v825 = vld [vmem:[%s778 + $0x14] sm:$0xf]
        %v826 = vld [vmem:[%s778 + $0x18] sm:$0xf]
        %v827 = vld [vmem:[%s778 + $0x1c] sm:$0xf]
        %v828 = vld [vmem:[%s781] sm:$0x1]
        %v829 = vld [vmem:[%s784] sm:$0x1]
        %v830 = vld [vmem:[%s787] sm:$0x1]
        %v831 = vpack.c.bf16 %v800, %v799
        %v833 = vlaneseq
        %v834 = vshrl.u32 %v833, 7
        %v835 = vsub.s32 0, %v834
        %v836 = vrot.slane %v807, %v835
        %v842 = vunpack.c.l.b16 %v803
        %v843 = vunpack.c.l.b16 %v804
        %v844 = vunpack.c.l.b16 %v805
        %v845 = vunpack.c.l.b16 %v806
        %v846 = vpack.c.b16 %v843, %v842
        %v847 = vpack.c.b16 %v845, %v844
        %vm850 = vcmask 261120
        %v852 = vsel %vm850, %v831, 0
        %854 = vmatprep.subr.bf16.mxu0 0
        %855 = vmatpush1.bf16.msra.mxu0 %v846
        %856 = vmatprep.subr.bf16.mxu0 0
        %857 = vmatpush1.bf16.msra.mxu0 %v847
        %858 = vmatprep.subr.bf16.mxu0 0
        %859 = vmatpush1.bf16.msra.mxu0 0
        %860 = vmatprep.subr.bf16.mxu0 0
        %861 = vmatpush1.bf16.msra.mxu0 0
        %862 = vmatprep.subr.bf16.mxu0 0
        %863 = vmatpush1.bf16.msra.mxu0 0
        %864 = vmatprep.subr.bf16.mxu0 0
        %865 = vmatpush1.bf16.msra.mxu0 0
        %866 = vmatprep.subr.bf16.mxu0 0
        %867 = vmatpush1.bf16.msra.mxu0 0
        %868 = vmatprep.subr.bf16.mxu0 0
        %869 = vmatpush1.bf16.msra.mxu0 0
        %870 = vmatprep.subr.bf16.mxu0 0
        %871 = vmatpush1.bf16.msra.mxu0 0
        %872 = vmatprep.subr.bf16.mxu0 0
        %873 = vmatpush1.bf16.msra.mxu0 0
        %874 = vmatprep.subr.bf16.mxu0 0
        %875 = vmatpush1.bf16.msra.mxu0 0
        %876 = vmatprep.subr.bf16.mxu0 0
        %877 = vmatpush1.bf16.msra.mxu0 0
        %878 = vmatprep.subr.bf16.mxu0 0
        %879 = vmatpush1.bf16.msra.mxu0 0
        %880 = vmatprep.subr.bf16.mxu0 0
        %881 = vmatpush1.bf16.msra.mxu0 0
        %882 = vmatprep.subr.bf16.mxu0 0
        %883 = vmatpush1.bf16.msra.mxu0 0
        %884 = vmatprep.subr.bf16.mxu0 0
        %885 = vmatpush1.bf16.msra.mxu0 0
        %886 = vmatprep.mubr.bf16.mxu0 0
        %887 = vmatmul.mubr.bf16.gmra.mrb[0].mxu0 %v852
        %v888 = vpop.f32.mrb[0].mxu0
        %v889 = vadd.f32 %v836, %v888
        %v890 = vpop.f32.mrb[0].mxu0
        %v891 = vpop.f32.mrb[0].mxu0
        %v892 = vadd.f32 %v836, %v891
        %v893 = vpop.f32.mrb[0].mxu0
        %894 = vdwg.mxu0
        %897 = vrot.lane.b32.xlu0 %v889, 112
        %v898 = vpop.permute.xlu0 %897
        %899 = vrot.lane.b32.xlu0 %v892, 112
        %v900 = vpop.permute.xlu0 %899
        %v903 = vcombine.high %v889, 0.0
        %v905 = vunpack.c.l.s4 1983009808
        %v906 = vunpack.c.0.s8 %v905
        %v907 = vlaneseq
        %v908 = vshrl.u32 %v907, 7
        %v909 = vsub.s32 %v906, %v908
        %v910 = vrot.slane %v889, %v909
        %v912 = vunpack.c.l.s4 1983009808
        %v913 = vunpack.c.0.s8 %v912
        %v914 = vlaneseq
        %v915 = vshrl.u32 %v914, 7
        %v916 = vsub.s32 %v913, %v915
        %v917 = vrot.slane %v903, %v916
        %v918 = vcombine.high %v898, 0.0
        %v920 = vunpack.c.l.s4 1983009808
        %v921 = vunpack.c.0.s8 %v920
        %v922 = vlaneseq
        %v923 = vshrl.u32 %v922, 7
        %v924 = vsub.s32 %v921, %v923
        %v925 = vrot.slane %v898, %v924
        %v927 = vunpack.c.l.s4 1983009808
        %v928 = vunpack.c.0.s8 %v927
        %v929 = vlaneseq
        %v930 = vshrl.u32 %v929, 7
        %v931 = vsub.s32 %v928, %v930
        %v932 = vrot.slane %v918, %v931
        %v933 = vcombine.low %v910, %v925
        %v934 = vcombine.high %v910, %v925
        %v936 = vunpack.c.l.s4 1934713408
        %v937 = vunpack.c.0.s8 %v936
        %v938 = vlaneseq
        %v939 = vshrl.u32 %v938, 7
        %v940 = vsub.s32 %v937, %v939
        %v941 = vrot.slane %v933, %v940
        %v943 = vunpack.c.l.s4 1934713408
        %v944 = vunpack.c.0.s8 %v943
        %v945 = vlaneseq
        %v946 = vshrl.u32 %v945, 7
        %v947 = vsub.s32 %v944, %v946
        %v948 = vrot.slane %v934, %v947
        %v949 = vcombine.low %v917, %v932
        %v950 = vcombine.high %v917, %v932
        %v952 = vunpack.c.l.s4 1934713408
        %v953 = vunpack.c.0.s8 %v952
        %v954 = vlaneseq
        %v955 = vshrl.u32 %v954, 7
        %v956 = vsub.s32 %v953, %v955
        %v957 = vrot.slane %v949, %v956
        %v959 = vunpack.c.l.s4 1934713408
        %v960 = vunpack.c.0.s8 %v959
        %v961 = vlaneseq
        %v962 = vshrl.u32 %v961, 7
        %v963 = vsub.s32 %v960, %v962
        %v964 = vrot.slane %v950, %v963
        %v965 = vcombine.high %v941, 0.0
        %v966 = vcombine.high %v948, 0.0
        %v967 = vcombine.high %v957, 0.0
        %v968 = vcombine.high %v964, 0.0
        %v969 = vcombine.high %v892, 0.0
        %v971 = vunpack.c.l.s4 1983009808
        %v972 = vunpack.c.0.s8 %v971
        %v973 = vlaneseq
        %v974 = vshrl.u32 %v973, 7
        %v975 = vsub.s32 %v972, %v974
        %v976 = vrot.slane %v892, %v975
        %v978 = vunpack.c.l.s4 1983009808
        %v979 = vunpack.c.0.s8 %v978
        %v980 = vlaneseq
        %v981 = vshrl.u32 %v980, 7
        %v982 = vsub.s32 %v979, %v981
        %v983 = vrot.slane %v969, %v982
        %v984 = vcombine.high %v900, 0.0
        %v986 = vunpack.c.l.s4 1983009808
        %v987 = vunpack.c.0.s8 %v986
        %v988 = vlaneseq
        %v989 = vshrl.u32 %v988, 7
        %v990 = vsub.s32 %v987, %v989
        %v991 = vrot.slane %v900, %v990
        %v993 = vunpack.c.l.s4 1983009808
        %v994 = vunpack.c.0.s8 %v993
        %v995 = vlaneseq
        %v996 = vshrl.u32 %v995, 7
        %v997 = vsub.s32 %v994, %v996
        %v998 = vrot.slane %v984, %v997
        %v999 = vcombine.low %v976, %v991
        %v1000 = vcombine.high %v976, %v991
        %v1002 = vunpack.c.l.s4 1934713408
        %v1003 = vunpack.c.0.s8 %v1002
        %v1004 = vlaneseq
        %v1005 = vshrl.u32 %v1004, 7
        %v1006 = vsub.s32 %v1003, %v1005
        %v1007 = vrot.slane %v999, %v1006
        %v1009 = vunpack.c.l.s4 1934713408
        %v1010 = vunpack.c.0.s8 %v1009
        %v1011 = vlaneseq
        %v1012 = vshrl.u32 %v1011, 7
        %v1013 = vsub.s32 %v1010, %v1012
        %v1014 = vrot.slane %v1000, %v1013
        %v1015 = vcombine.low %v983, %v998
        %v1016 = vcombine.high %v983, %v998
        %v1018 = vunpack.c.l.s4 1934713408
        %v1019 = vunpack.c.0.s8 %v1018
        %v1020 = vlaneseq
        %v1021 = vshrl.u32 %v1020, 7
        %v1022 = vsub.s32 %v1019, %v1021
        %v1023 = vrot.slane %v1015, %v1022
        %v1025 = vunpack.c.l.s4 1934713408
        %v1026 = vunpack.c.0.s8 %v1025
        %v1027 = vlaneseq
        %v1028 = vshrl.u32 %v1027, 7
        %v1029 = vsub.s32 %v1026, %v1028
        %v1030 = vrot.slane %v1016, %v1029
        %v1031 = vcombine.high %v1007, 0.0
        %v1032 = vcombine.high %v1014, 0.0
        %v1033 = vcombine.high %v1023, 0.0
        %v1034 = vcombine.high %v1030, 0.0
        %v1035 = vcombine.low %v941, %v948
        %v1037 = vunpack.c.l.s4 1983009808
        %v1038 = vunpack.c.0.s8 %v1037
        %v1039 = vlaneseq
        %v1040 = vshrl.u32 %v1039, 7
        %v1041 = vsub.s32 %v1038, %v1040
        %v1042 = vrot.slane %v1035, %v1041
        %v1043 = vcombine.low %v965, %v966
        %v1045 = vunpack.c.l.s4 1983009808
        %v1046 = vunpack.c.0.s8 %v1045
        %v1047 = vlaneseq
        %v1048 = vshrl.u32 %v1047, 7
        %v1049 = vsub.s32 %v1046, %v1048
        %v1050 = vrot.slane %v1043, %v1049
        %v1051 = vcombine.low %v957, %v964
        %v1053 = vunpack.c.l.s4 1983009808
        %v1054 = vunpack.c.0.s8 %v1053
        %v1055 = vlaneseq
        %v1056 = vshrl.u32 %v1055, 7
        %v1057 = vsub.s32 %v1054, %v1056
        %v1058 = vrot.slane %v1051, %v1057
        %v1059 = vcombine.low %v967, %v968
        %v1061 = vunpack.c.l.s4 1983009808
        %v1062 = vunpack.c.0.s8 %v1061
        %v1063 = vlaneseq
        %v1064 = vshrl.u32 %v1063, 7
        %v1065 = vsub.s32 %v1062, %v1064
        %v1066 = vrot.slane %v1059, %v1065
        %v1067 = vcombine.low %v1042, %v1050
        %v1069 = vunpack.c.l.s4 1934713408
        %v1070 = vunpack.c.0.s8 %v1069
        %v1071 = vlaneseq
        %v1072 = vshrl.u32 %v1071, 7
        %v1073 = vsub.s32 %v1070, %v1072
        %v1074 = vrot.slane %v1067, %v1073
        %v1075 = vcombine.low %v1058, %v1066
        %v1077 = vunpack.c.l.s4 1934713408
        %v1078 = vunpack.c.0.s8 %v1077
        %v1079 = vlaneseq
        %v1080 = vshrl.u32 %v1079, 7
        %v1081 = vsub.s32 %v1078, %v1080
        %v1082 = vrot.slane %v1075, %v1081
        %v1083 = vcombine.low %v1074, %v1082
        %v1084 = vcombine.high %v1074, %v1082
        %v1085 = vcombine.low %v1007, %v1014
        %v1087 = vunpack.c.l.s4 1983009808
        %v1088 = vunpack.c.0.s8 %v1087
        %v1089 = vlaneseq
        %v1090 = vshrl.u32 %v1089, 7
        %v1091 = vsub.s32 %v1088, %v1090
        %v1092 = vrot.slane %v1085, %v1091
        %v1093 = vcombine.low %v1031, %v1032
        %v1095 = vunpack.c.l.s4 1983009808
        %v1096 = vunpack.c.0.s8 %v1095
        %v1097 = vlaneseq
        %v1098 = vshrl.u32 %v1097, 7
        %v1099 = vsub.s32 %v1096, %v1098
        %v1100 = vrot.slane %v1093, %v1099
        %v1101 = vcombine.low %v1023, %v1030
        %v1103 = vunpack.c.l.s4 1983009808
        %v1104 = vunpack.c.0.s8 %v1103
        %v1105 = vlaneseq
        %v1106 = vshrl.u32 %v1105, 7
        %v1107 = vsub.s32 %v1104, %v1106
        %v1108 = vrot.slane %v1101, %v1107
        %v1109 = vcombine.low %v1033, %v1034
        %v1111 = vunpack.c.l.s4 1983009808
        %v1112 = vunpack.c.0.s8 %v1111
        %v1113 = vlaneseq
        %v1114 = vshrl.u32 %v1113, 7
        %v1115 = vsub.s32 %v1112, %v1114
        %v1116 = vrot.slane %v1109, %v1115
        %v1117 = vcombine.low %v1092, %v1100
        %v1119 = vunpack.c.l.s4 1934713408
        %v1120 = vunpack.c.0.s8 %v1119
        %v1121 = vlaneseq
        %v1122 = vshrl.u32 %v1121, 7
        %v1123 = vsub.s32 %v1120, %v1122
        %v1124 = vrot.slane %v1117, %v1123
        %v1125 = vcombine.low %v1108, %v1116
        %v1127 = vunpack.c.l.s4 1934713408
        %v1128 = vunpack.c.0.s8 %v1127
        %v1129 = vlaneseq
        %v1130 = vshrl.u32 %v1129, 7
        %v1131 = vsub.s32 %v1128, %v1130
        %v1132 = vrot.slane %v1125, %v1131
        %v1133 = vcombine.low %v1124, %v1132
        %v1134 = vcombine.high %v1124, %v1132
        %v1135 = vpack.c.bf16 %v1083, %v1083
        %v1136 = vpack.c.bf16 %v1084, %v1084
        %v1137 = vpack.c.bf16 %v1133, %v1133
        %v1138 = vpack.c.bf16 %v1134, %v1134
        %1139 = vrot.lane.b32.xlu0 %v889, 96
        %v1140 = vpop.permute.xlu0 %1139
        %1141 = vrot.lane.b32.xlu0 %v892, 96
        %v1142 = vpop.permute.xlu0 %1141
        %1143 = vrot.lane.b32.xlu0 %v898, 96
        %v1144 = vpop.permute.xlu0 %1143
        %1145 = vrot.lane.b32.xlu0 %v900, 96
        %v1146 = vpop.permute.xlu0 %1145
        %v1151 = vcombine.high %v1140, 0.0
        %v1153 = vunpack.c.l.s4 1983009808
        %v1154 = vunpack.c.0.s8 %v1153
        %v1155 = vlaneseq
        %v1156 = vshrl.u32 %v1155, 7
        %v1157 = vsub.s32 %v1154, %v1156
        %v1158 = vrot.slane %v1140, %v1157
        %v1160 = vunpack.c.l.s4 1983009808
        %v1161 = vunpack.c.0.s8 %v1160
        %v1162 = vlaneseq
        %v1163 = vshrl.u32 %v1162, 7
        %v1164 = vsub.s32 %v1161, %v1163
        %v1165 = vrot.slane %v1151, %v1164
        %v1166 = vcombine.high %v1144, 0.0
        %v1168 = vunpack.c.l.s4 1983009808
        %v1169 = vunpack.c.0.s8 %v1168
        %v1170 = vlaneseq
        %v1171 = vshrl.u32 %v1170, 7
        %v1172 = vsub.s32 %v1169, %v1171
        %v1173 = vrot.slane %v1144, %v1172
        %v1175 = vunpack.c.l.s4 1983009808
        %v1176 = vunpack.c.0.s8 %v1175
        %v1177 = vlaneseq
        %v1178 = vshrl.u32 %v1177, 7
        %v1179 = vsub.s32 %v1176, %v1178
        %v1180 = vrot.slane %v1166, %v1179
        %v1181 = vcombine.low %v1158, %v1173
        %v1182 = vcombine.high %v1158, %v1173
        %v1184 = vunpack.c.l.s4 1934713408
        %v1185 = vunpack.c.0.s8 %v1184
        %v1186 = vlaneseq
        %v1187 = vshrl.u32 %v1186, 7
        %v1188 = vsub.s32 %v1185, %v1187
        %v1189 = vrot.slane %v1181, %v1188
        %v1191 = vunpack.c.l.s4 1934713408
        %v1192 = vunpack.c.0.s8 %v1191
        %v1193 = vlaneseq
        %v1194 = vshrl.u32 %v1193, 7
        %v1195 = vsub.s32 %v1192, %v1194
        %v1196 = vrot.slane %v1182, %v1195
        %v1197 = vcombine.low %v1165, %v1180
        %v1198 = vcombine.high %v1165, %v1180
        %v1200 = vunpack.c.l.s4 1934713408
        %v1201 = vunpack.c.0.s8 %v1200
        %v1202 = vlaneseq
        %v1203 = vshrl.u32 %v1202, 7
        %v1204 = vsub.s32 %v1201, %v1203
        %v1205 = vrot.slane %v1197, %v1204
        %v1207 = vunpack.c.l.s4 1934713408
        %v1208 = vunpack.c.0.s8 %v1207
        %v1209 = vlaneseq
        %v1210 = vshrl.u32 %v1209, 7
        %v1211 = vsub.s32 %v1208, %v1210
        %v1212 = vrot.slane %v1198, %v1211
        %v1213 = vcombine.high %v1189, 0.0
        %v1214 = vcombine.high %v1196, 0.0
        %v1215 = vcombine.high %v1205, 0.0
        %v1216 = vcombine.high %v1212, 0.0
        %v1217 = vcombine.high %v1142, 0.0
        %v1219 = vunpack.c.l.s4 1983009808
        %v1220 = vunpack.c.0.s8 %v1219
        %v1221 = vlaneseq
        %v1222 = vshrl.u32 %v1221, 7
        %v1223 = vsub.s32 %v1220, %v1222
        %v1224 = vrot.slane %v1142, %v1223
        %v1226 = vunpack.c.l.s4 1983009808
        %v1227 = vunpack.c.0.s8 %v1226
        %v1228 = vlaneseq
        %v1229 = vshrl.u32 %v1228, 7
        %v1230 = vsub.s32 %v1227, %v1229
        %v1231 = vrot.slane %v1217, %v1230
        %v1232 = vcombine.high %v1146, 0.0
        %v1234 = vunpack.c.l.s4 1983009808
        %v1235 = vunpack.c.0.s8 %v1234
        %v1236 = vlaneseq
        %v1237 = vshrl.u32 %v1236, 7
        %v1238 = vsub.s32 %v1235, %v1237
        %v1239 = vrot.slane %v1146, %v1238
        %v1241 = vunpack.c.l.s4 1983009808
        %v1242 = vunpack.c.0.s8 %v1241
        %v1243 = vlaneseq
        %v1244 = vshrl.u32 %v1243, 7
        %v1245 = vsub.s32 %v1242, %v1244
        %v1246 = vrot.slane %v1232, %v1245
        %v1247 = vcombine.low %v1224, %v1239
        %v1248 = vcombine.high %v1224, %v1239
        %v1250 = vunpack.c.l.s4 1934713408
        %v1251 = vunpack.c.0.s8 %v1250
        %v1252 = vlaneseq
        %v1253 = vshrl.u32 %v1252, 7
        %v1254 = vsub.s32 %v1251, %v1253
        %v1255 = vrot.slane %v1247, %v1254
        %v1257 = vunpack.c.l.s4 1934713408
        %v1258 = vunpack.c.0.s8 %v1257
        %v1259 = vlaneseq
        %v1260 = vshrl.u32 %v1259, 7
        %v1261 = vsub.s32 %v1258, %v1260
        %v1262 = vrot.slane %v1248, %v1261
        %v1263 = vcombine.low %v1231, %v1246
        %v1264 = vcombine.high %v1231, %v1246
        %v1266 = vunpack.c.l.s4 1934713408
        %v1267 = vunpack.c.0.s8 %v1266
        %v1268 = vlaneseq
        %v1269 = vshrl.u32 %v1268, 7
        %v1270 = vsub.s32 %v1267, %v1269
        %v1271 = vrot.slane %v1263, %v1270
        %v1273 = vunpack.c.l.s4 1934713408
        %v1274 = vunpack.c.0.s8 %v1273
        %v1275 = vlaneseq
        %v1276 = vshrl.u32 %v1275, 7
        %v1277 = vsub.s32 %v1274, %v1276
        %v1278 = vrot.slane %v1264, %v1277
        %v1279 = vcombine.high %v1255, 0.0
        %v1280 = vcombine.high %v1262, 0.0
        %v1281 = vcombine.high %v1271, 0.0
        %v1282 = vcombine.high %v1278, 0.0
        %v1283 = vcombine.low %v1189, %v1196
        %v1285 = vunpack.c.l.s4 1983009808
        %v1286 = vunpack.c.0.s8 %v1285
        %v1287 = vlaneseq
        %v1288 = vshrl.u32 %v1287, 7
        %v1289 = vsub.s32 %v1286, %v1288
        %v1290 = vrot.slane %v1283, %v1289
        %v1291 = vcombine.low %v1213, %v1214
        %v1293 = vunpack.c.l.s4 1983009808
        %v1294 = vunpack.c.0.s8 %v1293
        %v1295 = vlaneseq
        %v1296 = vshrl.u32 %v1295, 7
        %v1297 = vsub.s32 %v1294, %v1296
        %v1298 = vrot.slane %v1291, %v1297
        %v1299 = vcombine.low %v1205, %v1212
        %v1301 = vunpack.c.l.s4 1983009808
        %v1302 = vunpack.c.0.s8 %v1301
        %v1303 = vlaneseq
        %v1304 = vshrl.u32 %v1303, 7
        %v1305 = vsub.s32 %v1302, %v1304
        %v1306 = vrot.slane %v1299, %v1305
        %v1307 = vcombine.low %v1215, %v1216
        %v1309 = vunpack.c.l.s4 1983009808
        %v1310 = vunpack.c.0.s8 %v1309
        %v1311 = vlaneseq
        %v1312 = vshrl.u32 %v1311, 7
        %v1313 = vsub.s32 %v1310, %v1312
        %v1314 = vrot.slane %v1307, %v1313
        %v1315 = vcombine.low %v1290, %v1298
        %v1317 = vunpack.c.l.s4 1934713408
        %v1318 = vunpack.c.0.s8 %v1317
        %v1319 = vlaneseq
        %v1320 = vshrl.u32 %v1319, 7
        %v1321 = vsub.s32 %v1318, %v1320
        %v1322 = vrot.slane %v1315, %v1321
        %v1323 = vcombine.low %v1306, %v1314
        %v1325 = vunpack.c.l.s4 1934713408
        %v1326 = vunpack.c.0.s8 %v1325
        %v1327 = vlaneseq
        %v1328 = vshrl.u32 %v1327, 7
        %v1329 = vsub.s32 %v1326, %v1328
        %v1330 = vrot.slane %v1323, %v1329
        %v1331 = vcombine.low %v1322, %v1330
        %v1332 = vcombine.high %v1322, %v1330
        %v1333 = vcombine.low %v1255, %v1262
        %v1335 = vunpack.c.l.s4 1983009808
        %v1336 = vunpack.c.0.s8 %v1335
        %v1337 = vlaneseq
        %v1338 = vshrl.u32 %v1337, 7
        %v1339 = vsub.s32 %v1336, %v1338
        %v1340 = vrot.slane %v1333, %v1339
        %v1341 = vcombine.low %v1279, %v1280
        %v1343 = vunpack.c.l.s4 1983009808
        %v1344 = vunpack.c.0.s8 %v1343
        %v1345 = vlaneseq
        %v1346 = vshrl.u32 %v1345, 7
        %v1347 = vsub.s32 %v1344, %v1346
        %v1348 = vrot.slane %v1341, %v1347
        %v1349 = vcombine.low %v1271, %v1278
        %v1351 = vunpack.c.l.s4 1983009808
        %v1352 = vunpack.c.0.s8 %v1351
        %v1353 = vlaneseq
        %v1354 = vshrl.u32 %v1353, 7
        %v1355 = vsub.s32 %v1352, %v1354
        %v1356 = vrot.slane %v1349, %v1355
        %v1357 = vcombine.low %v1281, %v1282
        %v1359 = vunpack.c.l.s4 1983009808
        %v1360 = vunpack.c.0.s8 %v1359
        %v1361 = vlaneseq
        %v1362 = vshrl.u32 %v1361, 7
        %v1363 = vsub.s32 %v1360, %v1362
        %v1364 = vrot.slane %v1357, %v1363
        %v1365 = vcombine.low %v1340, %v1348
        %v1367 = vunpack.c.l.s4 1934713408
        %v1368 = vunpack.c.0.s8 %v1367
        %v1369 = vlaneseq
        %v1370 = vshrl.u32 %v1369, 7
        %v1371 = vsub.s32 %v1368, %v1370
        %v1372 = vrot.slane %v1365, %v1371
        %v1373 = vcombine.low %v1356, %v1364
        %v1375 = vunpack.c.l.s4 1934713408
        %v1376 = vunpack.c.0.s8 %v1375
        %v1377 = vlaneseq
        %v1378 = vshrl.u32 %v1377, 7
        %v1379 = vsub.s32 %v1376, %v1378
        %v1380 = vrot.slane %v1373, %v1379
        %v1381 = vcombine.low %v1372, %v1380
        %v1382 = vcombine.high %v1372, %v1380
        %v1383 = vpack.c.bf16 %v1331, %v1331
        %v1384 = vpack.c.bf16 %v1332, %v1332
        %v1385 = vpack.c.bf16 %v1381, %v1381
        %v1386 = vpack.c.bf16 %v1382, %v1382
        %1387 = vrot.lane.b32.xlu0 %v889, 64
        %v1388 = vpop.permute.xlu0 %1387
        %1389 = vrot.lane.b32.xlu0 %v892, 64
        %v1390 = vpop.permute.xlu0 %1389
        %1391 = vrot.lane.b32.xlu0 %v898, 64
        %v1392 = vpop.permute.xlu0 %1391
        %1393 = vrot.lane.b32.xlu0 %v900, 64
        %v1394 = vpop.permute.xlu0 %1393
        %v1399 = vcombine.high %v1388, 0.0
        %v1401 = vunpack.c.l.s4 1983009808
        %v1402 = vunpack.c.0.s8 %v1401
        %v1403 = vlaneseq
        %v1404 = vshrl.u32 %v1403, 7
        %v1405 = vsub.s32 %v1402, %v1404
        %v1406 = vrot.slane %v1388, %v1405
        %v1408 = vunpack.c.l.s4 1983009808
        %v1409 = vunpack.c.0.s8 %v1408
        %v1410 = vlaneseq
        %v1411 = vshrl.u32 %v1410, 7
        %v1412 = vsub.s32 %v1409, %v1411
        %v1413 = vrot.slane %v1399, %v1412
        %v1414 = vcombine.high %v1392, 0.0
        %v1416 = vunpack.c.l.s4 1983009808
        %v1417 = vunpack.c.0.s8 %v1416
        %v1418 = vlaneseq
        %v1419 = vshrl.u32 %v1418, 7
        %v1420 = vsub.s32 %v1417, %v1419
        %v1421 = vrot.slane %v1392, %v1420
        %v1423 = vunpack.c.l.s4 1983009808
        %v1424 = vunpack.c.0.s8 %v1423
        %v1425 = vlaneseq
        %v1426 = vshrl.u32 %v1425, 7
        %v1427 = vsub.s32 %v1424, %v1426
        %v1428 = vrot.slane %v1414, %v1427
        %v1429 = vcombine.low %v1406, %v1421
        %v1430 = vcombine.high %v1406, %v1421
        %v1432 = vunpack.c.l.s4 1934713408
        %v1433 = vunpack.c.0.s8 %v1432
        %v1434 = vlaneseq
        %v1435 = vshrl.u32 %v1434, 7
        %v1436 = vsub.s32 %v1433, %v1435
        %v1437 = vrot.slane %v1429, %v1436
        %v1439 = vunpack.c.l.s4 1934713408
        %v1440 = vunpack.c.0.s8 %v1439
        %v1441 = vlaneseq
        %v1442 = vshrl.u32 %v1441, 7
        %v1443 = vsub.s32 %v1440, %v1442
        %v1444 = vrot.slane %v1430, %v1443
        %v1445 = vcombine.low %v1413, %v1428
        %v1446 = vcombine.high %v1413, %v1428
        %v1448 = vunpack.c.l.s4 1934713408
        %v1449 = vunpack.c.0.s8 %v1448
        %v1450 = vlaneseq
        %v1451 = vshrl.u32 %v1450, 7
        %v1452 = vsub.s32 %v1449, %v1451
        %v1453 = vrot.slane %v1445, %v1452
        %v1455 = vunpack.c.l.s4 1934713408
        %v1456 = vunpack.c.0.s8 %v1455
        %v1457 = vlaneseq
        %v1458 = vshrl.u32 %v1457, 7
        %v1459 = vsub.s32 %v1456, %v1458
        %v1460 = vrot.slane %v1446, %v1459
        %v1461 = vcombine.high %v1437, 0.0
        %v1462 = vcombine.high %v1444, 0.0
        %v1463 = vcombine.high %v1453, 0.0
        %v1464 = vcombine.high %v1460, 0.0
        %v1465 = vcombine.high %v1390, 0.0
        %v1467 = vunpack.c.l.s4 1983009808
        %v1468 = vunpack.c.0.s8 %v1467
        %v1469 = vlaneseq
        %v1470 = vshrl.u32 %v1469, 7
        %v1471 = vsub.s32 %v1468, %v1470
        %v1472 = vrot.slane %v1390, %v1471
        %v1474 = vunpack.c.l.s4 1983009808
        %v1475 = vunpack.c.0.s8 %v1474
        %v1476 = vlaneseq
        %v1477 = vshrl.u32 %v1476, 7
        %v1478 = vsub.s32 %v1475, %v1477
        %v1479 = vrot.slane %v1465, %v1478
        %v1480 = vcombine.high %v1394, 0.0
        %v1482 = vunpack.c.l.s4 1983009808
        %v1483 = vunpack.c.0.s8 %v1482
        %v1484 = vlaneseq
        %v1485 = vshrl.u32 %v1484, 7
        %v1486 = vsub.s32 %v1483, %v1485
        %v1487 = vrot.slane %v1394, %v1486
        %v1489 = vunpack.c.l.s4 1983009808
        %v1490 = vunpack.c.0.s8 %v1489
        %v1491 = vlaneseq
        %v1492 = vshrl.u32 %v1491, 7
        %v1493 = vsub.s32 %v1490, %v1492
        %v1494 = vrot.slane %v1480, %v1493
        %v1495 = vcombine.low %v1472, %v1487
        %v1496 = vcombine.high %v1472, %v1487
        %v1498 = vunpack.c.l.s4 1934713408
        %v1499 = vunpack.c.0.s8 %v1498
        %v1500 = vlaneseq
        %v1501 = vshrl.u32 %v1500, 7
        %v1502 = vsub.s32 %v1499, %v1501
        %v1503 = vrot.slane %v1495, %v1502
        %v1505 = vunpack.c.l.s4 1934713408
        %v1506 = vunpack.c.0.s8 %v1505
        %v1507 = vlaneseq
        %v1508 = vshrl.u32 %v1507, 7
        %v1509 = vsub.s32 %v1506, %v1508
        %v1510 = vrot.slane %v1496, %v1509
        %v1511 = vcombine.low %v1479, %v1494
        %v1512 = vcombine.high %v1479, %v1494
        %v1514 = vunpack.c.l.s4 1934713408
        %v1515 = vunpack.c.0.s8 %v1514
        %v1516 = vlaneseq
        %v1517 = vshrl.u32 %v1516, 7
        %v1518 = vsub.s32 %v1515, %v1517
        %v1519 = vrot.slane %v1511, %v1518
        %v1521 = vunpack.c.l.s4 1934713408
        %v1522 = vunpack.c.0.s8 %v1521
        %v1523 = vlaneseq
        %v1524 = vshrl.u32 %v1523, 7
        %v1525 = vsub.s32 %v1522, %v1524
        %v1526 = vrot.slane %v1512, %v1525
        %v1527 = vcombine.high %v1503, 0.0
        %v1528 = vcombine.high %v1510, 0.0
        %v1529 = vcombine.high %v1519, 0.0
        %v1530 = vcombine.high %v1526, 0.0
        %v1531 = vcombine.low %v1437, %v1444
        %v1533 = vunpack.c.l.s4 1983009808
        %v1534 = vunpack.c.0.s8 %v1533
        %v1535 = vlaneseq
        %v1536 = vshrl.u32 %v1535, 7
        %v1537 = vsub.s32 %v1534, %v1536
        %v1538 = vrot.slane %v1531, %v1537
        %v1539 = vcombine.low %v1461, %v1462
        %v1541 = vunpack.c.l.s4 1983009808
        %v1542 = vunpack.c.0.s8 %v1541
        %v1543 = vlaneseq
        %v1544 = vshrl.u32 %v1543, 7
        %v1545 = vsub.s32 %v1542, %v1544
        %v1546 = vrot.slane %v1539, %v1545
        %v1547 = vcombine.low %v1453, %v1460
        %v1549 = vunpack.c.l.s4 1983009808
        %v1550 = vunpack.c.0.s8 %v1549
        %v1551 = vlaneseq
        %v1552 = vshrl.u32 %v1551, 7
        %v1553 = vsub.s32 %v1550, %v1552
        %v1554 = vrot.slane %v1547, %v1553
        %v1555 = vcombine.low %v1463, %v1464
        %v1557 = vunpack.c.l.s4 1983009808
        %v1558 = vunpack.c.0.s8 %v1557
        %v1559 = vlaneseq
        %v1560 = vshrl.u32 %v1559, 7
        %v1561 = vsub.s32 %v1558, %v1560
        %v1562 = vrot.slane %v1555, %v1561
        %v1563 = vcombine.low %v1538, %v1546
        %v1565 = vunpack.c.l.s4 1934713408
        %v1566 = vunpack.c.0.s8 %v1565
        %v1567 = vlaneseq
        %v1568 = vshrl.u32 %v1567, 7
        %v1569 = vsub.s32 %v1566, %v1568
        %v1570 = vrot.slane %v1563, %v1569
        %v1571 = vcombine.low %v1554, %v1562
        %v1573 = vunpack.c.l.s4 1934713408
        %v1574 = vunpack.c.0.s8 %v1573
        %v1575 = vlaneseq
        %v1576 = vshrl.u32 %v1575, 7
        %v1577 = vsub.s32 %v1574, %v1576
        %v1578 = vrot.slane %v1571, %v1577
        %v1579 = vcombine.low %v1570, %v1578
        %v1580 = vcombine.high %v1570, %v1578
        %v1581 = vcombine.low %v1503, %v1510
        %v1583 = vunpack.c.l.s4 1983009808
        %v1584 = vunpack.c.0.s8 %v1583
        %v1585 = vlaneseq
        %v1586 = vshrl.u32 %v1585, 7
        %v1587 = vsub.s32 %v1584, %v1586
        %v1588 = vrot.slane %v1581, %v1587
        %v1589 = vcombine.low %v1527, %v1528
        %v1591 = vunpack.c.l.s4 1983009808
        %v1592 = vunpack.c.0.s8 %v1591
        %v1593 = vlaneseq
        %v1594 = vshrl.u32 %v1593, 7
        %v1595 = vsub.s32 %v1592, %v1594
        %v1596 = vrot.slane %v1589, %v1595
        %v1597 = vcombine.low %v1519, %v1526
        %v1599 = vunpack.c.l.s4 1983009808
        %v1600 = vunpack.c.0.s8 %v1599
        %v1601 = vlaneseq
        %v1602 = vshrl.u32 %v1601, 7
        %v1603 = vsub.s32 %v1600, %v1602
        %v1604 = vrot.slane %v1597, %v1603
        %v1605 = vcombine.low %v1529, %v1530
        %v1607 = vunpack.c.l.s4 1983009808
        %v1608 = vunpack.c.0.s8 %v1607
        %v1609 = vlaneseq
        %v1610 = vshrl.u32 %v1609, 7
        %v1611 = vsub.s32 %v1608, %v1610
        %v1612 = vrot.slane %v1605, %v1611
        %v1613 = vcombine.low %v1588, %v1596
        %v1615 = vunpack.c.l.s4 1934713408
        %v1616 = vunpack.c.0.s8 %v1615
        %v1617 = vlaneseq
        %v1618 = vshrl.u32 %v1617, 7
        %v1619 = vsub.s32 %v1616, %v1618
        %v1620 = vrot.slane %v1613, %v1619
        %v1621 = vcombine.low %v1604, %v1612
        %v1623 = vunpack.c.l.s4 1934713408
        %v1624 = vunpack.c.0.s8 %v1623
        %v1625 = vlaneseq
        %v1626 = vshrl.u32 %v1625, 7
        %v1627 = vsub.s32 %v1624, %v1626
        %v1628 = vrot.slane %v1621, %v1627
        %v1629 = vcombine.low %v1620, %v1628
        %v1630 = vcombine.high %v1620, %v1628
        %v1631 = vpack.c.bf16 %v1579, %v1579
        %v1632 = vpack.c.bf16 %v1580, %v1580
        %v1633 = vpack.c.bf16 %v1629, %v1629
        %v1634 = vpack.c.bf16 %v1630, %v1630
        %vm1635 = vcmask 130048
        %v1637 = vsel %vm1635, %v1135, 0
        %v1640 = vsel %vm1635, %v1383, 0
        %1642 = vmatprep.subr.bf16.mxu0 0
        %1643 = vmatpush1.bf16.xpose.msra.mxu0 %v1640
        %1644 = vmatprep.subr.bf16.mxu0 0
        %1645 = vmatpush1.bf16.xpose.msra.mxu0 0
        %1646 = vmatprep.subr.bf16.mxu0 0
        %1647 = vmatpush1.bf16.xpose.msra.mxu0 0
        %1648 = vmatprep.subr.bf16.mxu0 0
        %1649 = vmatpush1.bf16.xpose.msra.mxu0 0
        %1650 = vmatprep.subr.bf16.mxu0 0
        %1651 = vmatpush1.bf16.xpose.msra.mxu0 0
        %1652 = vmatprep.subr.bf16.mxu0 0
        %1653 = vmatpush1.bf16.xpose.msra.mxu0 0
        %1654 = vmatprep.subr.bf16.mxu0 0
        %1655 = vmatpush1.bf16.xpose.msra.mxu0 0
        %1656 = vmatprep.subr.bf16.mxu0 0
        %1657 = vmatpush1.bf16.xpose.msra.mxu0 0
        %1658 = vmatprep.subr.bf16.mxu0 0
        %1659 = vmatpush1.bf16.xpose.msra.mxu0 0
        %1660 = vmatprep.subr.bf16.mxu0 0
        %1661 = vmatpush1.bf16.xpose.msra.mxu0 0
        %1662 = vmatprep.subr.bf16.mxu0 0
        %1663 = vmatpush1.bf16.xpose.msra.mxu0 0
        %1664 = vmatprep.subr.bf16.mxu0 0
        %1665 = vmatpush1.bf16.xpose.msra.mxu0 0
        %1666 = vmatprep.subr.bf16.mxu0 0
        %1667 = vmatpush1.bf16.xpose.msra.mxu0 0
        %1668 = vmatprep.subr.bf16.mxu0 0
        %1669 = vmatpush1.bf16.xpose.msra.mxu0 0
        %1670 = vmatprep.subr.bf16.mxu0 0
        %1671 = vmatpush1.bf16.xpose.msra.mxu0 0
        %1672 = vmatprep.subr.bf16.mxu0 0
        %1673 = vmatpush1.bf16.xpose.msra.mxu0 0
        %1674 = vmatprep.mubr.bf16.mxu0 0
        %1675 = vmatmul.mubr.bf16.gmra.mrb[0].mxu0 %v1637
        %v1676 = vpop.f32.mrb[0].mxu0
        %v1677 = vadd.f32 %v801, %v1676
        %v1678 = vpop.f32.mrb[0].mxu0
        %v1679 = vpop.f32.mrb[0].mxu0
        %v1680 = vpop.f32.mrb[0].mxu0
        %1681 = vdwg.mxu0
        %v1683 = vsel %vm1635, %v1136, 0
        %v1686 = vsel %vm1635, %v1384, 0
        %1688 = vmatprep.subr.bf16.mxu0 0
        %1689 = vmatpush1.bf16.xpose.msra.mxu0 %v1686
        %1690 = vmatprep.subr.bf16.mxu0 0
        %1691 = vmatpush1.bf16.xpose.msra.mxu0 0
        %1692 = vmatprep.subr.bf16.mxu0 0
        %1693 = vmatpush1.bf16.xpose.msra.mxu0 0
        %1694 = vmatprep.subr.bf16.mxu0 0
        %1695 = vmatpush1.bf16.xpose.msra.mxu0 0
        %1696 = vmatprep.subr.bf16.mxu0 0
        %1697 = vmatpush1.bf16.xpose.msra.mxu0 0
        %1698 = vmatprep.subr.bf16.mxu0 0
        %1699 = vmatpush1.bf16.xpose.msra.mxu0 0
        %1700 = vmatprep.subr.bf16.mxu0 0
        %1701 = vmatpush1.bf16.xpose.msra.mxu0 0
        %1702 = vmatprep.subr.bf16.mxu0 0
        %1703 = vmatpush1.bf16.xpose.msra.mxu0 0
        %1704 = vmatprep.subr.bf16.mxu0 0
        %1705 = vmatpush1.bf16.xpose.msra.mxu0 0
        %1706 = vmatprep.subr.bf16.mxu0 0
        %1707 = vmatpush1.bf16.xpose.msra.mxu0 0
        %1708 = vmatprep.subr.bf16.mxu0 0
        %1709 = vmatpush1.bf16.xpose.msra.mxu0 0
        %1710 = vmatprep.subr.bf16.mxu0 0
        %1711 = vmatpush1.bf16.xpose.msra.mxu0 0
        %1712 = vmatprep.subr.bf16.mxu0 0
        %1713 = vmatpush1.bf16.xpose.msra.mxu0 0
        %1714 = vmatprep.subr.bf16.mxu0 0
        %1715 = vmatpush1.bf16.xpose.msra.mxu0 0
        %1716 = vmatprep.subr.bf16.mxu0 0
        %1717 = vmatpush1.bf16.xpose.msra.mxu0 0
        %1718 = vmatprep.subr.bf16.mxu0 0
        %1719 = vmatpush1.bf16.xpose.msra.mxu0 0
        %1720 = vmatprep.mubr.bf16.mxu0 0
        %1721 = vmatmul.mubr.bf16.gmra.mrb[0].mxu0 %v1683
        %v1722 = vpop.f32.mrb[0].mxu0
        %v1723 = vadd.f32 %v801, %v1722
        %v1724 = vpop.f32.mrb[0].mxu0
        %v1725 = vpop.f32.mrb[0].mxu0
        %v1726 = vpop.f32.mrb[0].mxu0
        %1727 = vdwg.mxu0
        %v1729 = vsel %vm1635, %v1137, 0
        %v1732 = vsel %vm1635, %v1385, 0
        %1734 = vmatprep.subr.bf16.mxu0 0
        %1735 = vmatpush1.bf16.xpose.msra.mxu0 %v1732
        %1736 = vmatprep.subr.bf16.mxu0 0
        %1737 = vmatpush1.bf16.xpose.msra.mxu0 0
        %1738 = vmatprep.subr.bf16.mxu0 0
        %1739 = vmatpush1.bf16.xpose.msra.mxu0 0
        %1740 = vmatprep.subr.bf16.mxu0 0
        %1741 = vmatpush1.bf16.xpose.msra.mxu0 0
        %1742 = vmatprep.subr.bf16.mxu0 0
        %1743 = vmatpush1.bf16.xpose.msra.mxu0 0
        %1744 = vmatprep.subr.bf16.mxu0 0
        %1745 = vmatpush1.bf16.xpose.msra.mxu0 0
        %1746 = vmatprep.subr.bf16.mxu0 0
        %1747 = vmatpush1.bf16.xpose.msra.mxu0 0
        %1748 = vmatprep.subr.bf16.mxu0 0
        %1749 = vmatpush1.bf16.xpose.msra.mxu0 0
        %1750 = vmatprep.subr.bf16.mxu0 0
        %1751 = vmatpush1.bf16.xpose.msra.mxu0 0
        %1752 = vmatprep.subr.bf16.mxu0 0
        %1753 = vmatpush1.bf16.xpose.msra.mxu0 0
        %1754 = vmatprep.subr.bf16.mxu0 0
        %1755 = vmatpush1.bf16.xpose.msra.mxu0 0
        %1756 = vmatprep.subr.bf16.mxu0 0
        %1757 = vmatpush1.bf16.xpose.msra.mxu0 0
        %1758 = vmatprep.subr.bf16.mxu0 0
        %1759 = vmatpush1.bf16.xpose.msra.mxu0 0
        %1760 = vmatprep.subr.bf16.mxu0 0
        %1761 = vmatpush1.bf16.xpose.msra.mxu0 0
        %1762 = vmatprep.subr.bf16.mxu0 0
        %1763 = vmatpush1.bf16.xpose.msra.mxu0 0
        %1764 = vmatprep.subr.bf16.mxu0 0
        %1765 = vmatpush1.bf16.xpose.msra.mxu0 0
        %1766 = vmatprep.mubr.bf16.mxu0 0
        %1767 = vmatmul.mubr.bf16.gmra.mrb[0].mxu0 %v1729
        %v1768 = vpop.f32.mrb[0].mxu0
        %v1769 = vadd.f32 %v802, %v1768
        %v1770 = vpop.f32.mrb[0].mxu0
        %v1771 = vpop.f32.mrb[0].mxu0
        %v1772 = vpop.f32.mrb[0].mxu0
        %1773 = vdwg.mxu0
        %v1775 = vsel %vm1635, %v1138, 0
        %v1778 = vsel %vm1635, %v1386, 0
        %1780 = vmatprep.subr.bf16.mxu0 0
        %1781 = vmatpush1.bf16.xpose.msra.mxu0 %v1778
        %1782 = vmatprep.subr.bf16.mxu0 0
        %1783 = vmatpush1.bf16.xpose.msra.mxu0 0
        %1784 = vmatprep.subr.bf16.mxu0 0
        %1785 = vmatpush1.bf16.xpose.msra.mxu0 0
        %1786 = vmatprep.subr.bf16.mxu0 0
        %1787 = vmatpush1.bf16.xpose.msra.mxu0 0
        %1788 = vmatprep.subr.bf16.mxu0 0
        %1789 = vmatpush1.bf16.xpose.msra.mxu0 0
        %1790 = vmatprep.subr.bf16.mxu0 0
        %1791 = vmatpush1.bf16.xpose.msra.mxu0 0
        %1792 = vmatprep.subr.bf16.mxu0 0
        %1793 = vmatpush1.bf16.xpose.msra.mxu0 0
        %1794 = vmatprep.subr.bf16.mxu0 0
        %1795 = vmatpush1.bf16.xpose.msra.mxu0 0
        %1796 = vmatprep.subr.bf16.mxu0 0
        %1797 = vmatpush1.bf16.xpose.msra.mxu0 0
        %1798 = vmatprep.subr.bf16.mxu0 0
        %1799 = vmatpush1.bf16.xpose.msra.mxu0 0
        %1800 = vmatprep.subr.bf16.mxu0 0
        %1801 = vmatpush1.bf16.xpose.msra.mxu0 0
        %1802 = vmatprep.subr.bf16.mxu0 0
        %1803 = vmatpush1.bf16.xpose.msra.mxu0 0
        %1804 = vmatprep.subr.bf16.mxu0 0
        %1805 = vmatpush1.bf16.xpose.msra.mxu0 0
        %1806 = vmatprep.subr.bf16.mxu0 0
        %1807 = vmatpush1.bf16.xpose.msra.mxu0 0
        %1808 = vmatprep.subr.bf16.mxu0 0
        %1809 = vmatpush1.bf16.xpose.msra.mxu0 0
        %1810 = vmatprep.subr.bf16.mxu0 0
        %1811 = vmatpush1.bf16.xpose.msra.mxu0 0
        %1812 = vmatprep.mubr.bf16.mxu0 0
        %1813 = vmatmul.mubr.bf16.gmra.mrb[0].mxu0 %v1775
        %v1814 = vpop.f32.mrb[0].mxu0
        %v1815 = vadd.f32 %v802, %v1814
        %v1816 = vpop.f32.mrb[0].mxu0
        %v1817 = vpop.f32.mrb[0].mxu0
        %v1818 = vpop.f32.mrb[0].mxu0
        %1819 = vdwg.mxu0
        %vm1820 = vcmask 64512
        %v1821 = vsel %vm1820, %v1677, -inf
        %1822 = vmax.xlane.f32.xlu0 %v1821
        %v1823 = vpop.xlane.xlu0 %1822
        %v1824 = vsel %vm1820, %v1723, -inf
        %1825 = vmax.xlane.f32.xlu0 %v1824
        %v1826 = vpop.xlane.xlu0 %1825
        %v1827 = vsel %vm1820, %v1769, -inf
        %1828 = vmax.xlane.f32.xlu0 %v1827
        %v1829 = vpop.xlane.xlu0 %1828
        %v1830 = vsel %vm1820, %v1815, -inf
        %1831 = vmax.xlane.f32.xlu0 %v1830
        %v1832 = vpop.xlane.xlu0 %1831
        %v1833 = vsub.f32 %v1677, %v1823
        %v1834 = vsub.f32 %v1723, %v1826
        %v1835 = vsub.f32 %v1769, %v1829
        %v1836 = vsub.f32 %v1815, %v1832
        %v1837 = vmul.f32 %v1833, 1.442695
        %v1838 = vpow.pop %v1837
        %v1839 = vmul.f32 %v1834, 1.442695
        %v1840 = vpow.pop %v1839
        %v1841 = vmul.f32 %v1835, 1.442695
        %v1842 = vpow.pop %v1841
        %v1843 = vmul.f32 %v1836, 1.442695
        %v1844 = vpow.pop %v1843
        %v1845 = vsel %vm1820, %v1838, 0.0
        %1846 = vadd.xlane.f32.xlu0 %v1845
        %v1847 = vpop.xlane.xlu0 %1846
        %v1848 = vsel %vm1820, %v1840, 0.0
        %1849 = vadd.xlane.f32.xlu0 %v1848
        %v1850 = vpop.xlane.xlu0 %1849
        %v1851 = vsel %vm1820, %v1842, 0.0
        %1852 = vadd.xlane.f32.xlu0 %v1851
        %v1853 = vpop.xlane.xlu0 %1852
        %v1854 = vsel %vm1820, %v1844, 0.0
        %1855 = vadd.xlane.f32.xlu0 %v1854
        %v1856 = vpop.xlane.xlu0 %1855
        %v1857 = vrcp.pop %v1847
        %v1858 = vrcp.pop %v1850
        %v1859 = vrcp.pop %v1853
        %v1860 = vrcp.pop %v1856
        %v1861 = vmul.f32 %v1838, %v1857
        %v1862 = vmul.f32 %v1840, %v1858
        %v1863 = vmul.f32 %v1842, %v1859
        %v1864 = vmul.f32 %v1844, %v1860
        %v1865 = vpack.c.bf16 %v1861, %v1861
        %v1866 = vpack.c.bf16 %v1862, %v1862
        %v1867 = vpack.c.bf16 %v1863, %v1863
        %v1868 = vpack.c.bf16 %v1864, %v1864
        %v1870 = vsel %vm1820, %v1865, 0
        %vm1872 = vcmask 1043456
        %v1874 = vsel %vm1872, %v1631, 0
        %1876 = vmatprep.subr.bf16.mxu0 0
        %1877 = vmatpush1.bf16.msra.mxu0 %v1874
        %1878 = vmatprep.subr.bf16.mxu0 0
        %1879 = vmatpush1.bf16.msra.mxu0 0
        %1880 = vmatprep.subr.bf16.mxu0 0
        %1881 = vmatpush1.bf16.msra.mxu0 0
        %1882 = vmatprep.subr.bf16.mxu0 0
        %1883 = vmatpush1.bf16.msra.mxu0 0
        %1884 = vmatprep.subr.bf16.mxu0 0
        %1885 = vmatpush1.bf16.msra.mxu0 0
        %1886 = vmatprep.subr.bf16.mxu0 0
        %1887 = vmatpush1.bf16.msra.mxu0 0
        %1888 = vmatprep.subr.bf16.mxu0 0
        %1889 = vmatpush1.bf16.msra.mxu0 0
        %1890 = vmatprep.subr.bf16.mxu0 0
        %1891 = vmatpush1.bf16.msra.mxu0 0
        %1892 = vmatprep.subr.bf16.mxu0 0
        %1893 = vmatpush1.bf16.msra.mxu0 0
        %1894 = vmatprep.subr.bf16.mxu0 0
        %1895 = vmatpush1.bf16.msra.mxu0 0
        %1896 = vmatprep.subr.bf16.mxu0 0
        %1897 = vmatpush1.bf16.msra.mxu0 0
        %1898 = vmatprep.subr.bf16.mxu0 0
        %1899 = vmatpush1.bf16.msra.mxu0 0
        %1900 = vmatprep.subr.bf16.mxu0 0
        %1901 = vmatpush1.bf16.msra.mxu0 0
        %1902 = vmatprep.subr.bf16.mxu0 0
        %1903 = vmatpush1.bf16.msra.mxu0 0
        %1904 = vmatprep.subr.bf16.mxu0 0
        %1905 = vmatpush1.bf16.msra.mxu0 0
        %1906 = vmatprep.subr.bf16.mxu0 0
        %1907 = vmatpush1.bf16.msra.mxu0 0
        %1908 = vmatprep.mubr.bf16.mxu0 0
        %1909 = vmatmul.mubr.bf16.gmra.mrb[0].mxu0 %v1870
        %v1910 = vpop.f32.mrb[0].mxu0
        %v1911 = vadd.f32 0.0, %v1910
        %v1912 = vpop.f32.mrb[0].mxu0
        %v1913 = vpop.f32.mrb[0].mxu0
        %v1914 = vpop.f32.mrb[0].mxu0
        %1915 = vdwg.mxu0
        %v1917 = vsel %vm1820, %v1866, 0
        %v1920 = vsel %vm1872, %v1632, 0
        %1922 = vmatprep.subr.bf16.mxu0 0
        %1923 = vmatpush1.bf16.msra.mxu0 %v1920
        %1924 = vmatprep.subr.bf16.mxu0 0
        %1925 = vmatpush1.bf16.msra.mxu0 0
        %1926 = vmatprep.subr.bf16.mxu0 0
        %1927 = vmatpush1.bf16.msra.mxu0 0
        %1928 = vmatprep.subr.bf16.mxu0 0
        %1929 = vmatpush1.bf16.msra.mxu0 0
        %1930 = vmatprep.subr.bf16.mxu0 0
        %1931 = vmatpush1.bf16.msra.mxu0 0
        %1932 = vmatprep.subr.bf16.mxu0 0
        %1933 = vmatpush1.bf16.msra.mxu0 0
        %1934 = vmatprep.subr.bf16.mxu0 0
        %1935 = vmatpush1.bf16.msra.mxu0 0
        %1936 = vmatprep.subr.bf16.mxu0 0
        %1937 = vmatpush1.bf16.msra.mxu0 0
        %1938 = vmatprep.subr.bf16.mxu0 0
        %1939 = vmatpush1.bf16.msra.mxu0 0
        %1940 = vmatprep.subr.bf16.mxu0 0
        %1941 = vmatpush1.bf16.msra.mxu0 0
        %1942 = vmatprep.subr.bf16.mxu0 0
        %1943 = vmatpush1.bf16.msra.mxu0 0
        %1944 = vmatprep.subr.bf16.mxu0 0
        %1945 = vmatpush1.bf16.msra.mxu0 0
        %1946 = vmatprep.subr.bf16.mxu0 0
        %1947 = vmatpush1.bf16.msra.mxu0 0
        %1948 = vmatprep.subr.bf16.mxu0 0
        %1949 = vmatpush1.bf16.msra.mxu0 0
        %1950 = vmatprep.subr.bf16.mxu0 0
        %1951 = vmatpush1.bf16.msra.mxu0 0
        %1952 = vmatprep.subr.bf16.mxu0 0
        %1953 = vmatpush1.bf16.msra.mxu0 0
        %1954 = vmatprep.mubr.bf16.mxu0 0
        %1955 = vmatmul.mubr.bf16.gmra.mrb[0].mxu0 %v1917
        %v1956 = vpop.f32.mrb[0].mxu0
        %v1957 = vadd.f32 0.0, %v1956
        %v1958 = vpop.f32.mrb[0].mxu0
        %v1959 = vpop.f32.mrb[0].mxu0
        %v1960 = vpop.f32.mrb[0].mxu0
        %1961 = vdwg.mxu0
        %v1963 = vsel %vm1820, %v1867, 0
        %v1966 = vsel %vm1872, %v1633, 0
        %1968 = vmatprep.subr.bf16.mxu0 0
        %1969 = vmatpush1.bf16.msra.mxu0 %v1966
        %1970 = vmatprep.subr.bf16.mxu0 0
        %1971 = vmatpush1.bf16.msra.mxu0 0
        %1972 = vmatprep.subr.bf16.mxu0 0
        %1973 = vmatpush1.bf16.msra.mxu0 0
        %1974 = vmatprep.subr.bf16.mxu0 0
        %1975 = vmatpush1.bf16.msra.mxu0 0
        %1976 = vmatprep.subr.bf16.mxu0 0
        %1977 = vmatpush1.bf16.msra.mxu0 0
        %1978 = vmatprep.subr.bf16.mxu0 0
        %1979 = vmatpush1.bf16.msra.mxu0 0
        %1980 = vmatprep.subr.bf16.mxu0 0
        %1981 = vmatpush1.bf16.msra.mxu0 0
        %1982 = vmatprep.subr.bf16.mxu0 0
        %1983 = vmatpush1.bf16.msra.mxu0 0
        %1984 = vmatprep.subr.bf16.mxu0 0
        %1985 = vmatpush1.bf16.msra.mxu0 0
        %1986 = vmatprep.subr.bf16.mxu0 0
        %1987 = vmatpush1.bf16.msra.mxu0 0
        %1988 = vmatprep.subr.bf16.mxu0 0
        %1989 = vmatpush1.bf16.msra.mxu0 0
        %1990 = vmatprep.subr.bf16.mxu0 0
        %1991 = vmatpush1.bf16.msra.mxu0 0
        %1992 = vmatprep.subr.bf16.mxu0 0
        %1993 = vmatpush1.bf16.msra.mxu0 0
        %1994 = vmatprep.subr.bf16.mxu0 0
        %1995 = vmatpush1.bf16.msra.mxu0 0
        %1996 = vmatprep.subr.bf16.mxu0 0
        %1997 = vmatpush1.bf16.msra.mxu0 0
        %1998 = vmatprep.subr.bf16.mxu0 0
        %1999 = vmatpush1.bf16.msra.mxu0 0
        %2000 = vmatprep.mubr.bf16.mxu0 0
        %2001 = vmatmul.mubr.bf16.gmra.mrb[0].mxu0 %v1963
        %v2002 = vpop.f32.mrb[0].mxu0
        %v2003 = vadd.f32 0.0, %v2002
        %v2004 = vpop.f32.mrb[0].mxu0
        %v2005 = vpop.f32.mrb[0].mxu0
        %v2006 = vpop.f32.mrb[0].mxu0
        %2007 = vdwg.mxu0
        %v2009 = vsel %vm1820, %v1868, 0
        %v2012 = vsel %vm1872, %v1634, 0
        %2014 = vmatprep.subr.bf16.mxu0 0
        %2015 = vmatpush1.bf16.msra.mxu0 %v2012
        %2016 = vmatprep.subr.bf16.mxu0 0
        %2017 = vmatpush1.bf16.msra.mxu0 0
        %2018 = vmatprep.subr.bf16.mxu0 0
        %2019 = vmatpush1.bf16.msra.mxu0 0
        %2020 = vmatprep.subr.bf16.mxu0 0
        %2021 = vmatpush1.bf16.msra.mxu0 0
        %2022 = vmatprep.subr.bf16.mxu0 0
        %2023 = vmatpush1.bf16.msra.mxu0 0
        %2024 = vmatprep.subr.bf16.mxu0 0
        %2025 = vmatpush1.bf16.msra.mxu0 0
        %2026 = vmatprep.subr.bf16.mxu0 0
        %2027 = vmatpush1.bf16.msra.mxu0 0
        %2028 = vmatprep.subr.bf16.mxu0 0
        %2029 = vmatpush1.bf16.msra.mxu0 0
        %2030 = vmatprep.subr.bf16.mxu0 0
        %2031 = vmatpush1.bf16.msra.mxu0 0
        %2032 = vmatprep.subr.bf16.mxu0 0
        %2033 = vmatpush1.bf16.msra.mxu0 0
        %2034 = vmatprep.subr.bf16.mxu0 0
        %2035 = vmatpush1.bf16.msra.mxu0 0
        %2036 = vmatprep.subr.bf16.mxu0 0
        %2037 = vmatpush1.bf16.msra.mxu0 0
        %2038 = vmatprep.subr.bf16.mxu0 0
        %2039 = vmatpush1.bf16.msra.mxu0 0
        %2040 = vmatprep.subr.bf16.mxu0 0
        %2041 = vmatpush1.bf16.msra.mxu0 0
        %2042 = vmatprep.subr.bf16.mxu0 0
        %2043 = vmatpush1.bf16.msra.mxu0 0
        %2044 = vmatprep.subr.bf16.mxu0 0
        %2045 = vmatpush1.bf16.msra.mxu0 0
        %2046 = vmatprep.mubr.bf16.mxu0 0
        %2047 = vmatmul.mubr.bf16.gmra.mrb[0].mxu0 %v2009
        %v2048 = vpop.f32.mrb[0].mxu0
        %v2049 = vadd.f32 0.0, %v2048
        %v2050 = vpop.f32.mrb[0].mxu0
        %v2051 = vpop.f32.mrb[0].mxu0
        %v2052 = vpop.f32.mrb[0].mxu0
        %2053 = vdwg.mxu0
        %v2054 = vcombine.high %v1911, 0.0
        %v2056 = vunpack.c.l.s4 1983009808
        %v2057 = vunpack.c.0.s8 %v2056
        %v2058 = vlaneseq
        %v2059 = vshrl.u32 %v2058, 7
        %v2060 = vsub.s32 %v2057, %v2059
        %v2061 = vrot.slane %v1911, %v2060
        %v2063 = vunpack.c.l.s4 1983009808
        %v2064 = vunpack.c.0.s8 %v2063
        %v2065 = vlaneseq
        %v2066 = vshrl.u32 %v2065, 7
        %v2067 = vsub.s32 %v2064, %v2066
        %v2068 = vrot.slane %v2054, %v2067
        %v2069 = vcombine.high %v1957, 0.0
        %v2071 = vunpack.c.l.s4 1983009808
        %v2072 = vunpack.c.0.s8 %v2071
        %v2073 = vlaneseq
        %v2074 = vshrl.u32 %v2073, 7
        %v2075 = vsub.s32 %v2072, %v2074
        %v2076 = vrot.slane %v1957, %v2075
        %v2078 = vunpack.c.l.s4 1983009808
        %v2079 = vunpack.c.0.s8 %v2078
        %v2080 = vlaneseq
        %v2081 = vshrl.u32 %v2080, 7
        %v2082 = vsub.s32 %v2079, %v2081
        %v2083 = vrot.slane %v2069, %v2082
        %v2084 = vcombine.low %v2061, %v2076
        %v2085 = vcombine.high %v2061, %v2076
        %v2087 = vunpack.c.l.s4 1934713408
        %v2088 = vunpack.c.0.s8 %v2087
        %v2089 = vlaneseq
        %v2090 = vshrl.u32 %v2089, 7
        %v2091 = vsub.s32 %v2088, %v2090
        %v2092 = vrot.slane %v2084, %v2091
        %v2094 = vunpack.c.l.s4 1934713408
        %v2095 = vunpack.c.0.s8 %v2094
        %v2096 = vlaneseq
        %v2097 = vshrl.u32 %v2096, 7
        %v2098 = vsub.s32 %v2095, %v2097
        %v2099 = vrot.slane %v2085, %v2098
        %v2100 = vcombine.low %v2068, %v2083
        %v2101 = vcombine.high %v2068, %v2083
        %v2103 = vunpack.c.l.s4 1934713408
        %v2104 = vunpack.c.0.s8 %v2103
        %v2105 = vlaneseq
        %v2106 = vshrl.u32 %v2105, 7
        %v2107 = vsub.s32 %v2104, %v2106
        %v2108 = vrot.slane %v2100, %v2107
        %v2110 = vunpack.c.l.s4 1934713408
        %v2111 = vunpack.c.0.s8 %v2110
        %v2112 = vlaneseq
        %v2113 = vshrl.u32 %v2112, 7
        %v2114 = vsub.s32 %v2111, %v2113
        %v2115 = vrot.slane %v2101, %v2114
        %v2116 = vcombine.high %v2092, 0.0
        %v2117 = vcombine.high %v2099, 0.0
        %v2118 = vcombine.high %v2108, 0.0
        %v2119 = vcombine.high %v2115, 0.0
        %v2120 = vcombine.high %v2003, 0.0
        %v2122 = vunpack.c.l.s4 1983009808
        %v2123 = vunpack.c.0.s8 %v2122
        %v2124 = vlaneseq
        %v2125 = vshrl.u32 %v2124, 7
        %v2126 = vsub.s32 %v2123, %v2125
        %v2127 = vrot.slane %v2003, %v2126
        %v2129 = vunpack.c.l.s4 1983009808
        %v2130 = vunpack.c.0.s8 %v2129
        %v2131 = vlaneseq
        %v2132 = vshrl.u32 %v2131, 7
        %v2133 = vsub.s32 %v2130, %v2132
        %v2134 = vrot.slane %v2120, %v2133
        %v2135 = vcombine.high %v2049, 0.0
        %v2137 = vunpack.c.l.s4 1983009808
        %v2138 = vunpack.c.0.s8 %v2137
        %v2139 = vlaneseq
        %v2140 = vshrl.u32 %v2139, 7
        %v2141 = vsub.s32 %v2138, %v2140
        %v2142 = vrot.slane %v2049, %v2141
        %v2144 = vunpack.c.l.s4 1983009808
        %v2145 = vunpack.c.0.s8 %v2144
        %v2146 = vlaneseq
        %v2147 = vshrl.u32 %v2146, 7
        %v2148 = vsub.s32 %v2145, %v2147
        %v2149 = vrot.slane %v2135, %v2148
        %v2150 = vcombine.low %v2127, %v2142
        %v2151 = vcombine.high %v2127, %v2142
        %v2153 = vunpack.c.l.s4 1934713408
        %v2154 = vunpack.c.0.s8 %v2153
        %v2155 = vlaneseq
        %v2156 = vshrl.u32 %v2155, 7
        %v2157 = vsub.s32 %v2154, %v2156
        %v2158 = vrot.slane %v2150, %v2157
        %v2160 = vunpack.c.l.s4 1934713408
        %v2161 = vunpack.c.0.s8 %v2160
        %v2162 = vlaneseq
        %v2163 = vshrl.u32 %v2162, 7
        %v2164 = vsub.s32 %v2161, %v2163
        %v2165 = vrot.slane %v2151, %v2164
        %v2166 = vcombine.low %v2134, %v2149
        %v2167 = vcombine.high %v2134, %v2149
        %v2169 = vunpack.c.l.s4 1934713408
        %v2170 = vunpack.c.0.s8 %v2169
        %v2171 = vlaneseq
        %v2172 = vshrl.u32 %v2171, 7
        %v2173 = vsub.s32 %v2170, %v2172
        %v2174 = vrot.slane %v2166, %v2173
        %v2176 = vunpack.c.l.s4 1934713408
        %v2177 = vunpack.c.0.s8 %v2176
        %v2178 = vlaneseq
        %v2179 = vshrl.u32 %v2178, 7
        %v2180 = vsub.s32 %v2177, %v2179
        %v2181 = vrot.slane %v2167, %v2180
        %v2182 = vcombine.high %v2158, 0.0
        %v2183 = vcombine.high %v2165, 0.0
        %v2184 = vcombine.high %v2174, 0.0
        %v2185 = vcombine.high %v2181, 0.0
        %v2186 = vcombine.low %v2092, %v2099
        %v2188 = vunpack.c.l.s4 1983009808
        %v2189 = vunpack.c.0.s8 %v2188
        %v2190 = vlaneseq
        %v2191 = vshrl.u32 %v2190, 7
        %v2192 = vsub.s32 %v2189, %v2191
        %v2193 = vrot.slane %v2186, %v2192
        %v2194 = vcombine.low %v2116, %v2117
        %v2196 = vunpack.c.l.s4 1983009808
        %v2197 = vunpack.c.0.s8 %v2196
        %v2198 = vlaneseq
        %v2199 = vshrl.u32 %v2198, 7
        %v2200 = vsub.s32 %v2197, %v2199
        %v2201 = vrot.slane %v2194, %v2200
        %v2202 = vcombine.low %v2108, %v2115
        %v2204 = vunpack.c.l.s4 1983009808
        %v2205 = vunpack.c.0.s8 %v2204
        %v2206 = vlaneseq
        %v2207 = vshrl.u32 %v2206, 7
        %v2208 = vsub.s32 %v2205, %v2207
        %v2209 = vrot.slane %v2202, %v2208
        %v2210 = vcombine.low %v2118, %v2119
        %v2212 = vunpack.c.l.s4 1983009808
        %v2213 = vunpack.c.0.s8 %v2212
        %v2214 = vlaneseq
        %v2215 = vshrl.u32 %v2214, 7
        %v2216 = vsub.s32 %v2213, %v2215
        %v2217 = vrot.slane %v2210, %v2216
        %v2218 = vcombine.low %v2193, %v2201
        %v2220 = vunpack.c.l.s4 1934713408
        %v2221 = vunpack.c.0.s8 %v2220
        %v2222 = vlaneseq
        %v2223 = vshrl.u32 %v2222, 7
        %v2224 = vsub.s32 %v2221, %v2223
        %v2225 = vrot.slane %v2218, %v2224
        %v2226 = vcombine.low %v2209, %v2217
        %v2228 = vunpack.c.l.s4 1934713408
        %v2229 = vunpack.c.0.s8 %v2228
        %v2230 = vlaneseq
        %v2231 = vshrl.u32 %v2230, 7
        %v2232 = vsub.s32 %v2229, %v2231
        %v2233 = vrot.slane %v2226, %v2232
        %v2234 = vcombine.low %v2225, %v2233
        %v2235 = vcombine.high %v2225, %v2233
        %v2236 = vcombine.low %v2158, %v2165
        %v2238 = vunpack.c.l.s4 1983009808
        %v2239 = vunpack.c.0.s8 %v2238
        %v2240 = vlaneseq
        %v2241 = vshrl.u32 %v2240, 7
        %v2242 = vsub.s32 %v2239, %v2241
        %v2243 = vrot.slane %v2236, %v2242
        %v2244 = vcombine.low %v2182, %v2183
        %v2246 = vunpack.c.l.s4 1983009808
        %v2247 = vunpack.c.0.s8 %v2246
        %v2248 = vlaneseq
        %v2249 = vshrl.u32 %v2248, 7
        %v2250 = vsub.s32 %v2247, %v2249
        %v2251 = vrot.slane %v2244, %v2250
        %v2252 = vcombine.low %v2174, %v2181
        %v2254 = vunpack.c.l.s4 1983009808
        %v2255 = vunpack.c.0.s8 %v2254
        %v2256 = vlaneseq
        %v2257 = vshrl.u32 %v2256, 7
        %v2258 = vsub.s32 %v2255, %v2257
        %v2259 = vrot.slane %v2252, %v2258
        %v2260 = vcombine.low %v2184, %v2185
        %v2262 = vunpack.c.l.s4 1983009808
        %v2263 = vunpack.c.0.s8 %v2262
        %v2264 = vlaneseq
        %v2265 = vshrl.u32 %v2264, 7
        %v2266 = vsub.s32 %v2263, %v2265
        %v2267 = vrot.slane %v2260, %v2266
        %v2268 = vcombine.low %v2243, %v2251
        %v2270 = vunpack.c.l.s4 1934713408
        %v2271 = vunpack.c.0.s8 %v2270
        %v2272 = vlaneseq
        %v2273 = vshrl.u32 %v2272, 7
        %v2274 = vsub.s32 %v2271, %v2273
        %v2275 = vrot.slane %v2268, %v2274
        %v2276 = vcombine.low %v2259, %v2267
        %v2278 = vunpack.c.l.s4 1934713408
        %v2279 = vunpack.c.0.s8 %v2278
        %v2280 = vlaneseq
        %v2281 = vshrl.u32 %v2280, 7
        %v2282 = vsub.s32 %v2279, %v2281
        %v2283 = vrot.slane %v2276, %v2282
        %v2284 = vcombine.low %v2275, %v2283
        %v2285 = vcombine.high %v2275, %v2283
        %2288 = vrot.lane.b32.xlu0 %v2235, 16
        %v2289 = vpop.permute.xlu0 %2288
        %2290 = vrot.lane.b32.xlu0 %v2285, 16
        %v2291 = vpop.permute.xlu0 %2290
        %v2294 = vsel %vm1635, %v2234, %v2289
        %v2295 = vsel %vm1635, %v2284, %v2291
        %v2296 = vpack.c.bf16 %v2295, %v2294
        %v2298 = vlaneseq
        %v2299 = vshrl.u32 %v2298, 7
        %v2300 = vsub.s32 0, %v2299
        %v2301 = vrot.slane %v812, %v2300
        %v2307 = vunpack.c.l.b16 %v808
        %v2308 = vunpack.c.l.b16 %v809
        %v2309 = vunpack.c.l.b16 %v810
        %v2310 = vunpack.c.l.b16 %v811
        %v2311 = vpack.c.b16 %v2308, %v2307
        %v2312 = vpack.c.b16 %v2310, %v2309
        %v2316 = vsel %vm850, %v2296, 0
        %2318 = vmatprep.subr.bf16.mxu0 0
        %2319 = vmatpush1.bf16.msra.mxu0 %v2311
        %2320 = vmatprep.subr.bf16.mxu0 0
        %2321 = vmatpush1.bf16.msra.mxu0 %v2312
        %2322 = vmatprep.subr.bf16.mxu0 0
        %2323 = vmatpush1.bf16.msra.mxu0 0
        %2324 = vmatprep.subr.bf16.mxu0 0
        %2325 = vmatpush1.bf16.msra.mxu0 0
        %2326 = vmatprep.subr.bf16.mxu0 0
        %2327 = vmatpush1.bf16.msra.mxu0 0
        %2328 = vmatprep.subr.bf16.mxu0 0
        %2329 = vmatpush1.bf16.msra.mxu0 0
        %2330 = vmatprep.subr.bf16.mxu0 0
        %2331 = vmatpush1.bf16.msra.mxu0 0
        %2332 = vmatprep.subr.bf16.mxu0 0
        %2333 = vmatpush1.bf16.msra.mxu0 0
        %2334 = vmatprep.subr.bf16.mxu0 0
        %2335 = vmatpush1.bf16.msra.mxu0 0
        %2336 = vmatprep.subr.bf16.mxu0 0
        %2337 = vmatpush1.bf16.msra.mxu0 0
        %2338 = vmatprep.subr.bf16.mxu0 0
        %2339 = vmatpush1.bf16.msra.mxu0 0
        %2340 = vmatprep.subr.bf16.mxu0 0
        %2341 = vmatpush1.bf16.msra.mxu0 0
        %2342 = vmatprep.subr.bf16.mxu0 0
        %2343 = vmatpush1.bf16.msra.mxu0 0
        %2344 = vmatprep.subr.bf16.mxu0 0
        %2345 = vmatpush1.bf16.msra.mxu0 0
        %2346 = vmatprep.subr.bf16.mxu0 0
        %2347 = vmatpush1.bf16.msra.mxu0 0
        %2348 = vmatprep.subr.bf16.mxu0 0
        %2349 = vmatpush1.bf16.msra.mxu0 0
        %2350 = vmatprep.mubr.bf16.mxu0 0
        %2351 = vmatmul.mubr.bf16.gmra.mrb[0].mxu0 %v2316
        %v2352 = vpop.f32.mrb[0].mxu0
        %v2353 = vadd.f32 %v2301, %v2352
        %v2354 = vpop.f32.mrb[0].mxu0
        %v2355 = vpop.f32.mrb[0].mxu0
        %v2356 = vadd.f32 %v2301, %v2355
        %v2357 = vpop.f32.mrb[0].mxu0
        %2358 = vdwg.mxu0
        %v2359 = vadd.f32 %v799, %v2353
        %v2360 = vadd.f32 %v800, %v2356
        %v2361 = vsel %vm850, %v2359, 0.0
        %2362 = vadd.xlane.f32.xlu0 %v2361
        %v2363 = vpop.xlane.xlu0 %2362
        %v2364 = vsel %vm850, %v2360, 0.0
        %2365 = vadd.xlane.f32.xlu0 %v2364
        %v2366 = vpop.xlane.xlu0 %2365
        %v2367 = vrcp.pop 32.0
        %v2368 = vmul.f32 %v2363, %v2367
        %v2369 = vmul.f32 %v2366, %v2367
        %v2370 = vsub.f32 %v2359, %v2368
        %v2371 = vsub.f32 %v2360, %v2369
        %v2372 = vmul.f32 %v2370, %v2370
        %v2373 = vmul.f32 %v2371, %v2371
        %v2374 = vsel %vm850, %v2372, 0.0
        %2375 = vadd.xlane.f32.xlu0 %v2374
        %v2376 = vpop.xlane.xlu0 %2375
        %v2377 = vsel %vm850, %v2373, 0.0
        %2378 = vadd.xlane.f32.xlu0 %v2377
        %v2379 = vpop.xlane.xlu0 %2378
        %v2380 = vmul.f32 %v2376, %v2367
        %v2381 = vmul.f32 %v2379, %v2367
        %v2382 = vadd.f32 %v2380, 1e-05
        %v2383 = vadd.f32 %v2381, 1e-05
        %v2384 = vrsqrt.pop %v2382
        %v2385 = vrsqrt.pop %v2383
        %v2386 = vmul.f32 %v2370, %v2384
        %v2387 = vmul.f32 %v2371, %v2385
        %v2389 = vlaneseq
        %v2390 = vshrl.u32 %v2389, 7
        %v2391 = vsub.s32 0, %v2390
        %v2392 = vrot.slane %v813, %v2391
        %v2394 = vmul.f32 %v2386, %v2392
        %v2395 = vmul.f32 %v2387, %v2392
        %v2397 = vlaneseq
        %v2398 = vshrl.u32 %v2397, 7
        %v2399 = vsub.s32 0, %v2398
        %v2400 = vrot.slane %v814, %v2399
        %v2402 = vadd.f32 %v2394, %v2400
        %v2403 = vadd.f32 %v2395, %v2400
        %v2404 = vpack.c.bf16 %v2403, %v2402
        %v2406 = vlaneseq
        %v2407 = vshrl.u32 %v2406, 7
        %v2408 = vsub.s32 0, %v2407
        %v2409 = vrot.slane %v819, %v2408
        %v2415 = vunpack.c.l.b16 %v815
        %v2416 = vunpack.c.l.b16 %v816
        %v2417 = vunpack.c.l.b16 %v817
        %v2418 = vunpack.c.l.b16 %v818
        %v2419 = vpack.c.b16 %v2416, %v2415
        %v2420 = vpack.c.b16 %v2418, %v2417
        %v2424 = vsel %vm850, %v2404, 0
        %2426 = vmatprep.subr.bf16.mxu0 0
        %2427 = vmatpush1.bf16.msra.mxu0 %v2419
        %2428 = vmatprep.subr.bf16.mxu0 0
        %2429 = vmatpush1.bf16.msra.mxu0 %v2420
        %2430 = vmatprep.subr.bf16.mxu0 0
        %2431 = vmatpush1.bf16.msra.mxu0 0
        %2432 = vmatprep.subr.bf16.mxu0 0
        %2433 = vmatpush1.bf16.msra.mxu0 0
        %2434 = vmatprep.subr.bf16.mxu0 0
        %2435 = vmatpush1.bf16.msra.mxu0 0
        %2436 = vmatprep.subr.bf16.mxu0 0
        %2437 = vmatpush1.bf16.msra.mxu0 0
        %2438 = vmatprep.subr.bf16.mxu0 0
        %2439 = vmatpush1.bf16.msra.mxu0 0
        %2440 = vmatprep.subr.bf16.mxu0 0
        %2441 = vmatpush1.bf16.msra.mxu0 0
        %2442 = vmatprep.subr.bf16.mxu0 0
        %2443 = vmatpush1.bf16.msra.mxu0 0
        %2444 = vmatprep.subr.bf16.mxu0 0
        %2445 = vmatpush1.bf16.msra.mxu0 0
        %2446 = vmatprep.subr.bf16.mxu0 0
        %2447 = vmatpush1.bf16.msra.mxu0 0
        %2448 = vmatprep.subr.bf16.mxu0 0
        %2449 = vmatpush1.bf16.msra.mxu0 0
        %2450 = vmatprep.subr.bf16.mxu0 0
        %2451 = vmatpush1.bf16.msra.mxu0 0
        %2452 = vmatprep.subr.bf16.mxu0 0
        %2453 = vmatpush1.bf16.msra.mxu0 0
        %2454 = vmatprep.subr.bf16.mxu0 0
        %2455 = vmatpush1.bf16.msra.mxu0 0
        %2456 = vmatprep.subr.bf16.mxu0 0
        %2457 = vmatpush1.bf16.msra.mxu0 0
        %2458 = vmatprep.mubr.bf16.mxu0 0
        %2459 = vmatmul.mubr.bf16.gmra.mrb[0].mxu0 %v2424
        %v2460 = vpop.f32.mrb[0].mxu0
        %v2461 = vadd.f32 %v2409, %v2460
        %v2462 = vpop.f32.mrb[0].mxu0
        %v2463 = vpop.f32.mrb[0].mxu0
        %v2464 = vadd.f32 %v2409, %v2463
        %v2465 = vpop.f32.mrb[0].mxu0
        %2466 = vdwg.mxu0
        %v2467 = vmax.f32 %v2461, 0.0
        %v2468 = vmax.f32 %v2464, 0.0
        %v2469 = vpack.c.bf16 %v2468, %v2467
        %v2471 = vlaneseq
        %v2472 = vshrl.u32 %v2471, 7
        %v2473 = vsub.s32 0, %v2472
        %v2474 = vrot.slane %v828, %v2473
        %v2484 = vunpack.c.l.b16 %v820
        %v2485 = vunpack.c.l.b16 %v821
        %v2486 = vunpack.c.l.b16 %v822
        %v2487 = vunpack.c.l.b16 %v823
        %v2488 = vunpack.c.l.b16 %v824
        %v2489 = vunpack.c.l.b16 %v825
        %v2490 = vunpack.c.l.b16 %v826
        %v2491 = vunpack.c.l.b16 %v827
        %v2492 = vpack.c.b16 %v2485, %v2484
        %v2493 = vpack.c.b16 %v2487, %v2486
        %v2494 = vpack.c.b16 %v2489, %v2488
        %v2495 = vpack.c.b16 %v2491, %v2490
        %vm2500 = vcmask 523264
        %v2502 = vsel %vm2500, %v2469, 0
        %2504 = vmatprep.subr.bf16.mxu0 0
        %2505 = vmatpush1.bf16.msra.mxu0 %v2492
        %2506 = vmatprep.subr.bf16.mxu0 0
        %2507 = vmatpush1.bf16.msra.mxu0 %v2493
        %2508 = vmatprep.subr.bf16.mxu0 0
        %2509 = vmatpush1.bf16.msra.mxu0 %v2494
        %2510 = vmatprep.subr.bf16.mxu0 0
        %2511 = vmatpush1.bf16.msra.mxu0 %v2495
        %2512 = vmatprep.subr.bf16.mxu0 0
        %2513 = vmatpush1.bf16.msra.mxu0 0
        %2514 = vmatprep.subr.bf16.mxu0 0
        %2515 = vmatpush1.bf16.msra.mxu0 0
        %2516 = vmatprep.subr.bf16.mxu0 0
        %2517 = vmatpush1.bf16.msra.mxu0 0
        %2518 = vmatprep.subr.bf16.mxu0 0
        %2519 = vmatpush1.bf16.msra.mxu0 0
        %2520 = vmatprep.subr.bf16.mxu0 0
        %2521 = vmatpush1.bf16.msra.mxu0 0
        %2522 = vmatprep.subr.bf16.mxu0 0
        %2523 = vmatpush1.bf16.msra.mxu0 0
        %2524 = vmatprep.subr.bf16.mxu0 0
        %2525 = vmatpush1.bf16.msra.mxu0 0
        %2526 = vmatprep.subr.bf16.mxu0 0
        %2527 = vmatpush1.bf16.msra.mxu0 0
        %2528 = vmatprep.subr.bf16.mxu0 0
        %2529 = vmatpush1.bf16.msra.mxu0 0
        %2530 = vmatprep.subr.bf16.mxu0 0
        %2531 = vmatpush1.bf16.msra.mxu0 0
        %2532 = vmatprep.subr.bf16.mxu0 0
        %2533 = vmatpush1.bf16.msra.mxu0 0
        %2534 = vmatprep.subr.bf16.mxu0 0
        %2535 = vmatpush1.bf16.msra.mxu0 0
        %2536 = vmatprep.mubr.bf16.mxu0 0
        %2537 = vmatmul.mubr.bf16.gmra.mrb[0].mxu0 %v2502
        %v2538 = vpop.f32.mrb[0].mxu0
        %v2539 = vadd.f32 %v2474, %v2538
        %v2540 = vpop.f32.mrb[0].mxu0
        %v2541 = vpop.f32.mrb[0].mxu0
        %v2542 = vadd.f32 %v2474, %v2541
        %v2543 = vpop.f32.mrb[0].mxu0
        %2544 = vdwg.mxu0
        %v2545 = vadd.f32 %v2402, %v2539
        %v2546 = vadd.f32 %v2403, %v2542
        %v2547 = vsel %vm850, %v2545, 0.0
        %2548 = vadd.xlane.f32.xlu0 %v2547
        %v2549 = vpop.xlane.xlu0 %2548
        %v2550 = vsel %vm850, %v2546, 0.0
        %2551 = vadd.xlane.f32.xlu0 %v2550
        %v2552 = vpop.xlane.xlu0 %2551
        %v2553 = vmul.f32 %v2549, %v2367
        %v2554 = vmul.f32 %v2552, %v2367
        %v2555 = vsub.f32 %v2545, %v2553
        %v2556 = vsub.f32 %v2546, %v2554
        %v2557 = vmul.f32 %v2555, %v2555
        %v2558 = vmul.f32 %v2556, %v2556
        %v2559 = vsel %vm850, %v2557, 0.0
        %2560 = vadd.xlane.f32.xlu0 %v2559
        %v2561 = vpop.xlane.xlu0 %2560
        %v2562 = vsel %vm850, %v2558, 0.0
        %2563 = vadd.xlane.f32.xlu0 %v2562
        %v2564 = vpop.xlane.xlu0 %2563
        %v2565 = vmul.f32 %v2561, %v2367
        %v2566 = vmul.f32 %v2564, %v2367
        %v2567 = vadd.f32 %v2565, 1e-05
        %v2568 = vadd.f32 %v2566, 1e-05
        %v2569 = vrsqrt.pop %v2567
        %v2570 = vrsqrt.pop %v2568
        %v2571 = vmul.f32 %v2555, %v2569
        %v2572 = vmul.f32 %v2556, %v2570
        %v2574 = vlaneseq
        %v2575 = vshrl.u32 %v2574, 7
        %v2576 = vsub.s32 0, %v2575
        %v2577 = vrot.slane %v829, %v2576
        %v2579 = vmul.f32 %v2571, %v2577
        %v2580 = vmul.f32 %v2572, %v2577
        %v2582 = vlaneseq
        %v2583 = vshrl.u32 %v2582, 7
        %v2584 = vsub.s32 0, %v2583
        %v2585 = vrot.slane %v830, %v2584
        %v2587 = vadd.f32 %v2579, %v2585
        %v2588 = vadd.f32 %v2580, %v2585
        %2589 = vst.msk [vmem:[%s750] sm:$0xff] %vm850, %v2587
        %2590 = vst.msk [vmem:[%s750 + $0x8] sm:$0xff] %vm850, %v2588
        %s2591 = sand.u32 %s421, 1
        %s2592 = scalar_lea.sflag [#allocation4], %s2591
        %s2593 = sand.u32 %s421, 1
        %s2594 = smul.addr %s2593, 16
        %s2595 = scalar_lea.vmem [#allocation11], %s2594
        // Predicated region
        $region101: #{tpu_custom_call.1} parent=75 // pred_check
          %p2596 = pneg %p431
        $region102: #{tpu_custom_call.1} parent=75 // pred_check_branch
          %2598 = sbr.rel (%p2596) target = $region104
        $region103: #{tpu_custom_call.1} parent=75 // pred_region
          %s2599 = smul.u32 2, %s41
          %s2601 = ssub.s32 256, 256
          %2602 = vsyncadd %s2592, %s2601
          %s2603 = smul.addr %s2599, 128
          %s2604 = scalar_lea.hbm %s14, %s2603
          %s2605 = sshll.u32 %s2595, 4
          %s2606 = int_to_ptr.vmem [resolvable:$true] %s2605
          %2611 = dma.vmem_to_hbm [thread:$0]  %s2606, 256, %s2604, %s2592, 128, 128, 8
        $region104: #{tpu_custom_call.1} parent=75 // pred_fallthru
          _
      $region76: #{tpu_custom_call.1} parent=5 // pred_fallthru
        _
      %p2612 = scmp.le.s32.totalorder 2, %s32
      // Predicated region
      $region105: #{tpu_custom_call.1} parent=5 // pred_check
        %p2613 = pneg %p2612
      $region106: #{tpu_custom_call.1} parent=5 // pred_check_branch
        %2615 = sbr.rel (%p2613) target = $region108
      $region107: #{tpu_custom_call.1} parent=5 // pred_region
        %s2616 = ssub.s32 %s32, 2
        // Predicated region
        $region109: #{tpu_custom_call.1} parent=107 // pred_check
          %p2617 = pneg %p437
        $region110: #{tpu_custom_call.1} parent=107 // pred_check_branch
          %2619 = sbr.rel (%p2617) target = $region112
        $region111: #{tpu_custom_call.1} parent=107 // pred_region
          %s2620 = sand.u32 %s422, 1
          %s2621 = scalar_lea.sflag [#allocation4], %s2620
          %s2622 = sand.u32 %s422, 1
          %s2623 = smul.addr %s2622, 16
          %s2624 = scalar_lea.vmem [#allocation11], %s2623
          %2625 = dma.done %s2621, 256
        $region112: #{tpu_custom_call.1} parent=107 // pred_fallthru
          _
      $region108: #{tpu_custom_call.1} parent=5 // pred_fallthru
        _
    $region6: #{tpu_custom_call.1} parent=1 // loop_footer
      %s36 = sadd.s32 1, %s32
    $region7: #{tpu_custom_call.1} parent=1 // loop_footer_branch
      %31 = sbr.rel target = $region3
    $region8: #{tpu_custom_call.1} parent=1 // loop_exit
      _
    %2626 = vsyncpa [#allocation3], 1
    %s2627 = scalar_lea.sflag [#allocation3], 1
    %2628 = vsyncpa %s2627, 1
    %2629 = vsyncpa [#allocation6], 1
    %s2630 = scalar_lea.sflag [#allocation6], 1
    %2631 = vsyncpa %s2630, 1
    %2632 = vsyncpa [#allocation9], 1
    %s2633 = scalar_lea.sflag [#allocation9], 1
    %2634 = vsyncpa %s2633, 1
    %2635 = vsyncpa [#allocation4], 1
    %s2636 = scalar_lea.sflag [#allocation4], 1
    %2637 = vsyncpa %s2636, 1

</llo_original>
